<compile_context>
chip_gen: v6e
topology: v6e:2x2x1
jax: 0.10.0
libtpu: 0.0.40
codegen_flags: <defaults>
</compile_context>

<pallas_src>
import functools

import jax
import jax.numpy as jnp
from jax import lax
from jax.experimental import pallas as pl
from jax.experimental.pallas import tpu as pltpu

IN_FEATURES = 768
OUT_FEATURES = 768


def _linear_kernel(x_ref, w_ref, b_ref, o_ref):
    # x_ref: (tm, K) activations, w_ref: (N, K) resident weight (PyTorch layout),
    # b_ref: (1, N) bias, o_ref: (tm, N) output.
    acc = lax.dot_general(
        x_ref[...],
        w_ref[...],
        dimension_numbers=(((1,), (1,)), ((), ())),  # contract K of x with K of W
        preferred_element_type=jnp.float32,
    )
    o_ref[...] = (acc + b_ref[...]).astype(o_ref.dtype)


@functools.partial(jax.jit, static_argnames=("tm_max",))
def single_linear(x, weight, bias, *, tm_max=512):
    """y = x @ weight.T + bias, matching torch.nn.Linear(768, 768) semantics.

    x:      (..., 768)
    weight: (768, 768)  -- PyTorch layout (out_features, in_features)
    bias:   (768,)
    """
    orig_shape = x.shape
    K = IN_FEATURES
    N = OUT_FEATURES

    x2d = x.reshape(-1, K)
    M = x2d.shape[0]

    # Choose an M tile: single tile for small M (rounded up to sublane multiple),
    # otherwise tm_max-sized tiles; pad rows so the grid divides evenly.
    if M <= tm_max:
        tm = max(8, ((M + 7) // 8) * 8)
        Mp = tm
    else:
        tm = tm_max
        Mp = ((M + tm - 1) // tm) * tm

    if Mp != M:
        x2d = jnp.pad(x2d, ((0, Mp - M), (0, 0)))

    b2d = bias.reshape(1, N)

    out = pl.pallas_call(
        _linear_kernel,
        out_shape=jax.ShapeDtypeStruct((Mp, N), x.dtype),
        grid_spec=pltpu.PrefetchScalarGridSpec(
            num_scalar_prefetch=0,
            grid=(Mp // tm,),
            in_specs=[
                pl.BlockSpec((tm, K), lambda i: (i, 0)),   # activations, tiled on M
                pl.BlockSpec((N, K), lambda i: (0, 0)),    # weight, resident (no .T)
                pl.BlockSpec((1, N), lambda i: (0, 0)),    # bias, resident
            ],
            out_specs=pl.BlockSpec((tm, N), lambda i: (i, 0)),
        ),
        compiler_params=pltpu.CompilerParams(
            dimension_semantics=("parallel",),
            vmem_limit_bytes=32 * 1024 * 1024,  # fits v5e/v6e/v7x scoped budgets
        ),
    )(x2d, weight, b2d)

    if Mp != M:
        out = out[:M]
    return out.reshape(*orig_shape[:-1], N)


if __name__ == "__main__":
    key = jax.random.PRNGKey(0)
    k_x, k_w, k_b = jax.random.split(key, 3)

    # Deterministic parameter init mimicking nn.Linear's U(-1/sqrt(in), 1/sqrt(in)).
    bound = 1.0 / jnp.sqrt(jnp.float32(IN_FEATURES))
    weight = jax.random.uniform(
        k_w, (OUT_FEATURES, IN_FEATURES), jnp.float32, -bound, bound
    )
    bias = jax.random.uniform(k_b, (OUT_FEATURES,), jnp.float32, -bound, bound)

    # Small input consistent with the module: (batch=2, seq=8, hidden=768).
    x = jax.random.normal(k_x, (2, 8, IN_FEATURES), jnp.float32)

    y = single_linear(x, weight, bias)
    y = jax.block_until_ready(y)

    # Cross-check against plain JAX reference.
    y_ref = x @ weight.T + bias
    assert y.shape == (2, 8, OUT_FEATURES)
    assert jnp.allclose(y, y_ref, atol=1e-4, rtol=1e-4)

    print("KERNEL_OK")
</pallas_src>

<mosaic_0001>
module attributes {stable_mosaic.version = 11 : i64} {
  func.func @_linear_kernel(%arg0: i32, %arg1: memref<16x768xf32, #tpu.memory_space<vmem>>, %arg2: memref<768x768xf32, #tpu.memory_space<vmem>>, %arg3: memref<1x768xf32, #tpu.memory_space<vmem>>, %arg4: memref<16x768xf32, #tpu.memory_space<vmem>>) attributes {dimension_semantics = [#tpu.dimension_semantics<parallel>], iteration_bounds = array<i64: 1>, scalar_prefetch = 0 : i64, scratch_operands = 0 : i64, tpu.core_type = #tpu.core_type<tc>, window_params = [{transform_indices = @transform_0, window_bounds = array<i64: 16, 768>}, {pipeline_mode = #tpu.pipeline_mode<synchronous>, transform_indices = @transform_1, window_bounds = array<i64: 768, 768>}, {pipeline_mode = #tpu.pipeline_mode<synchronous>, transform_indices = @transform_2, window_bounds = array<i64: 1, 768>}, {transform_indices = @transform_3, window_bounds = array<i64: 16, 768>}]} {
    %c0 = arith.constant 0 : index
    %c0_0 = arith.constant 0 : index
    %0 = vector.load %arg1[%c0, %c0_0] : memref<16x768xf32, #tpu.memory_space<vmem>>, vector<16x768xf32>
    %c0_1 = arith.constant 0 : index
    %c0_2 = arith.constant 0 : index
    %1 = vector.load %arg2[%c0_1, %c0_2] : memref<768x768xf32, #tpu.memory_space<vmem>>, vector<768x768xf32>
    %cst = arith.constant dense<0.000000e+00> : vector<16x768xf32>
    %2 = tpu.matmul %0, %1, %cst {dimension_numbers = #tpu.dot_dimension_numbers<[1], [1], [0], [0], [0, 0, 1, 0], [], []>} : vector<16x768xf32>, vector<768x768xf32>, vector<16x768xf32> -> vector<16x768xf32>
    %c0_3 = arith.constant 0 : index
    %c0_4 = arith.constant 0 : index
    %3 = vector.load %arg3[%c0_3, %c0_4] : memref<1x768xf32, #tpu.memory_space<vmem>>, vector<1x768xf32>
    %4 = vector.broadcast %3 : vector<1x768xf32> to vector<16x768xf32>
    %5 = arith.addf %2, %4 : vector<16x768xf32>
    %c0_5 = arith.constant 0 : index
    %c0_6 = arith.constant 0 : index
    %6 = vector.load %arg4[%c0_5, %c0_6] : memref<16x768xf32, #tpu.memory_space<vmem>>, vector<16x768xf32>
    tpu.vector_store %arg4[%c0_5, %c0_6], %5 {strides = array<i32>} : memref<16x768xf32, #tpu.memory_space<vmem>>, vector<16x768xf32>,
    return
  }
  func.func @transform_0(%arg0: i32) -> (i32, i32) {
    %c0_i32 = arith.constant 0 : i32
    %c0_i32_0 = arith.constant 0 : i32
    return %arg0, %c0_i32 : i32, i32
  }
  func.func @transform_1(%arg0: i32) -> (i32, i32) {
    %c0_i32 = arith.constant 0 : i32
    %c0_i32_0 = arith.constant 0 : i32
    %c0_i32_1 = arith.constant 0 : i32
    return %c0_i32, %c0_i32_0 : i32, i32
  }
  func.func @transform_2(%arg0: i32) -> (i32, i32) {
    %c0_i32 = arith.constant 0 : i32
    %c0_i32_0 = arith.constant 0 : i32
    %c0_i32_1 = arith.constant 0 : i32
    return %c0_i32, %c0_i32_0 : i32, i32
  }
  func.func @transform_3(%arg0: i32) -> (i32, i32) {
    %c0_i32 = arith.constant 0 : i32
    %c0_i32_0 = arith.constant 0 : i32
    return %arg0, %c0_i32 : i32, i32
  }
}

</mosaic_0001>

<llo_original>
// kernel: single_linear.1
$region0: #{single_linear.1}
  #allocation0 [shape = 'u32[]', space=smem, size = 0x4, offset = 0x4, fixed_abs, tag = 'smem constant byte address 0x4 - core index']
  #allocation1 [shape = 'u32[144,128]{1,0:T(1,128)}', space=vmem, size = 0x12000, scoped, tag = 'internal scratch']
  %s0 = inlined_call_operand.hbm [shape: f32[16,768], index: 0, kind: input, shape index: {}]
  %s1 = inlined_call_operand.hbm [shape: f32[768,768], index: 1, kind: input, shape index: {}]
  %s2 = inlined_call_operand.vmem [shape: f32[1,768], index: 2, kind: input, shape index: {}]
  %s3 = inlined_call_operand.hbm [shape: f32[16,768], index: 3, kind: output, shape index: {}]
  %s4 = sld [smem:[#allocation0]]
  $region30: #{single_linear.1} parent=0
    _
  %s6 = ssub.s32 1, %s4
  %s7 = scalar_select 0, %s6, %s4
  $region1: #{single_linear.1} parent=0
    #allocation2 [shape = 'u8[49152]{0}', space=vmem, size = 0xc000, scoped, tag = 'input window, operand 0, single buffered']
    #allocation3 [shape = 's32[1]{0}', space=sflag, size = 0x4, scoped, tag = 'scoped memory for single_linear.1']
    #allocation4 [shape = 's32[1]{0}', space=sflag, size = 0x4, scoped, tag = 'scoped memory for single_linear.1']
    #allocation5 [shape = 'u8[2359296]{0}', space=vmem, size = 0x240000, scoped, tag = 'input window, operand 1, single buffered']
    #allocation6 [shape = 's32[1]{0}', space=sflag, size = 0x4, scoped, tag = 'scoped memory for single_linear.1']
    #allocation7 [shape = 'u8[49152]{0}', space=vmem, size = 0xc000, scoped, tag = 'output window, operand 0, single buffered']
    %8 = vsyncpa [#allocation3], 0
    %9 = vsyncpa [#allocation6], 0
    %10 = vsyncpa [#allocation4], 0
    // Predicated region
    $region2: #{single_linear.1} parent=1 // pred_check
      _
    $region3: #{single_linear.1} parent=1 // pred_check_branch
      %12 = sbr.rel (0) target = $region5
    $region4: #{single_linear.1} parent=1 // pred_region
      %s14 = ssub.s32 1536, 1536
      %15 = vsyncadd [#allocation3], %s14
      %s16 = sshll.u32 [#allocation2], 4
      %s17 = int_to_ptr.vmem [resolvable:$true] %s16
      %22 = dma.hbm_to_vmem [thread:$0]  %s0, 1536, %s17, [#allocation3], 768, 768, 48
    $region5: #{single_linear.1} parent=1 // pred_fallthru
      _
    // Predicated region
    $region6: #{single_linear.1} parent=1 // pred_check
      _
    $region7: #{single_linear.1} parent=1 // pred_check_branch
      %24 = sbr.rel (0) target = $region9
    $region8: #{single_linear.1} parent=1 // pred_region
      %s26 = ssub.s32 73728, 73728
      %27 = vsyncadd [#allocation6], %s26
      %s28 = sshll.u32 [#allocation5], 4
      %s29 = int_to_ptr.vmem [resolvable:$true] %s28
      %34 = dma.hbm_to_vmem [thread:$0]  %s1, 73728, %s29, [#allocation6], 768, 768, 48
    $region9: #{single_linear.1} parent=1 // pred_fallthru
      _
    // Predicated region
    $region10: #{single_linear.1} parent=1 // pred_check
      _
    $region11: #{single_linear.1} parent=1 // pred_check_branch
      %36 = sbr.rel (0) target = $region13
    $region12: #{single_linear.1} parent=1 // pred_region
      _
    $region13: #{single_linear.1} parent=1 // pred_fallthru
      _
    // Predicated region
    $region14: #{single_linear.1} parent=1 // pred_check
      _
    $region15: #{single_linear.1} parent=1 // pred_check_branch
      %38 = sbr.rel (0) target = $region17
    $region16: #{single_linear.1} parent=1 // pred_region
      %39 = dma.done [#allocation3], 1536
    $region17: #{single_linear.1} parent=1 // pred_fallthru
      _
    // Predicated region
    $region18: #{single_linear.1} parent=1 // pred_check
      _
    $region19: #{single_linear.1} parent=1 // pred_check_branch
      %41 = sbr.rel (0) target = $region21
    $region20: #{single_linear.1} parent=1 // pred_region
      %42 = dma.done [#allocation6], 73728
    $region21: #{single_linear.1} parent=1 // pred_fallthru
      _
    %v43 = vld [vmem:[#allocation2] sm:$0xff]
    %v44 = vld [vmem:[#allocation2 + $0x8] sm:$0xff]
    %v45 = vld [vmem:[#allocation2 + $0x10] sm:$0xff]
    %v46 = vld [vmem:[#allocation2 + $0x18] sm:$0xff]
    %v47 = vld [vmem:[#allocation2 + $0x20] sm:$0xff]
    %v48 = vld [vmem:[#allocation2 + $0x28] sm:$0xff]
    %v49 = vld [vmem:[#allocation2 + $0x30] sm:$0xff]
    %v50 = vld [vmem:[#allocation2 + $0x38] sm:$0xff]
    %v51 = vld [vmem:[#allocation2 + $0x40] sm:$0xff]
    %v52 = vld [vmem:[#allocation2 + $0x48] sm:$0xff]
    %v53 = vld [vmem:[#allocation2 + $0x50] sm:$0xff]
    %v54 = vld [vmem:[#allocation2 + $0x58] sm:$0xff]
    %v55 = vld [vmem:[#allocation5] sm:$0xff]
    %v56 = vld [vmem:[#allocation5 + $0x8] sm:$0xff]
    %v57 = vld [vmem:[#allocation5 + $0x10] sm:$0xff]
    %v58 = vld [vmem:[#allocation5 + $0x18] sm:$0xff]
    %v59 = vld [vmem:[#allocation5 + $0x20] sm:$0xff]
    %v60 = vld [vmem:[#allocation5 + $0x28] sm:$0xff]
    %v61 = vld [vmem:[#allocation5 + $0x30] sm:$0xff]
    %v62 = vld [vmem:[#allocation5 + $0x38] sm:$0xff]
    %v63 = vld [vmem:[#allocation5 + $0x40] sm:$0xff]
    %v64 = vld [vmem:[#allocation5 + $0x48] sm:$0xff]
    %v65 = vld [vmem:[#allocation5 + $0x50] sm:$0xff]
    %v66 = vld [vmem:[#allocation5 + $0x58] sm:$0xff]
    %v67 = vld [vmem:[#allocation5 + $0x60] sm:$0xff]
    %v68 = vld [vmem:[#allocation5 + $0x68] sm:$0xff]
    %v69 = vld [vmem:[#allocation5 + $0x70] sm:$0xff]
    %v70 = vld [vmem:[#allocation5 + $0x78] sm:$0xff]
    %v71 = vld [vmem:[#allocation5 + $0x80] sm:$0xff]
    %v72 = vld [vmem:[#allocation5 + $0x88] sm:$0xff]
    %v73 = vld [vmem:[#allocation5 + $0x90] sm:$0xff]
    %v74 = vld [vmem:[#allocation5 + $0x98] sm:$0xff]
    %v75 = vld [vmem:[#allocation5 + $0xa0] sm:$0xff]
    %v76 = vld [vmem:[#allocation5 + $0xa8] sm:$0xff]
    %v77 = vld [vmem:[#allocation5 + $0xb0] sm:$0xff]
    %v78 = vld [vmem:[#allocation5 + $0xb8] sm:$0xff]
    %v79 = vld [vmem:[#allocation5 + $0xc0] sm:$0xff]
    %v80 = vld [vmem:[#allocation5 + $0xc8] sm:$0xff]
    %v81 = vld [vmem:[#allocation5 + $0xd0] sm:$0xff]
    %v82 = vld [vmem:[#allocation5 + $0xd8] sm:$0xff]
    %v83 = vld [vmem:[#allocation5 + $0xe0] sm:$0xff]
    %v84 = vld [vmem:[#allocation5 + $0xe8] sm:$0xff]
    %v85 = vld [vmem:[#allocation5 + $0xf0] sm:$0xff]
    %v86 = vld [vmem:[#allocation5 + $0xf8] sm:$0xff]
    %v87 = vld [vmem:[#allocation5 + $0x100] sm:$0xff]
    %v88 = vld [vmem:[#allocation5 + $0x108] sm:$0xff]
    %v89 = vld [vmem:[#allocation5 + $0x110] sm:$0xff]
    %v90 = vld [vmem:[#allocation5 + $0x118] sm:$0xff]
    %v91 = vld [vmem:[#allocation5 + $0x120] sm:$0xff]
    %v92 = vld [vmem:[#allocation5 + $0x128] sm:$0xff]
    %v93 = vld [vmem:[#allocation5 + $0x130] sm:$0xff]
    %v94 = vld [vmem:[#allocation5 + $0x138] sm:$0xff]
    %v95 = vld [vmem:[#allocation5 + $0x140] sm:$0xff]
    %v96 = vld [vmem:[#allocation5 + $0x148] sm:$0xff]
    %v97 = vld [vmem:[#allocation5 + $0x150] sm:$0xff]
    %v98 = vld [vmem:[#allocation5 + $0x158] sm:$0xff]
    %v99 = vld [vmem:[#allocation5 + $0x160] sm:$0xff]
    %v100 = vld [vmem:[#allocation5 + $0x168] sm:$0xff]
    %v101 = vld [vmem:[#allocation5 + $0x170] sm:$0xff]
    %v102 = vld [vmem:[#allocation5 + $0x178] sm:$0xff]
    %v103 = vld [vmem:[#allocation5 + $0x180] sm:$0xff]
    %v104 = vld [vmem:[#allocation5 + $0x188] sm:$0xff]
    %v105 = vld [vmem:[#allocation5 + $0x190] sm:$0xff]
    %v106 = vld [vmem:[#allocation5 + $0x198] sm:$0xff]
    %v107 = vld [vmem:[#allocation5 + $0x1a0] sm:$0xff]
    %v108 = vld [vmem:[#allocation5 + $0x1a8] sm:$0xff]
    %v109 = vld [vmem:[#allocation5 + $0x1b0] sm:$0xff]
    %v110 = vld [vmem:[#allocation5 + $0x1b8] sm:$0xff]
    %v111 = vld [vmem:[#allocation5 + $0x1c0] sm:$0xff]
    %v112 = vld [vmem:[#allocation5 + $0x1c8] sm:$0xff]
    %v113 = vld [vmem:[#allocation5 + $0x1d0] sm:$0xff]
    %v114 = vld [vmem:[#allocation5 + $0x1d8] sm:$0xff]
    %v115 = vld [vmem:[#allocation5 + $0x1e0] sm:$0xff]
    %v116 = vld [vmem:[#allocation5 + $0x1e8] sm:$0xff]
    %v117 = vld [vmem:[#allocation5 + $0x1f0] sm:$0xff]
    %v118 = vld [vmem:[#allocation5 + $0x1f8] sm:$0xff]
    %v119 = vld [vmem:[#allocation5 + $0x200] sm:$0xff]
    %v120 = vld [vmem:[#allocation5 + $0x208] sm:$0xff]
    %v121 = vld [vmem:[#allocation5 + $0x210] sm:$0xff]
    %v122 = vld [vmem:[#allocation5 + $0x218] sm:$0xff]
    %v123 = vld [vmem:[#allocation5 + $0x220] sm:$0xff]
    %v124 = vld [vmem:[#allocation5 + $0x228] sm:$0xff]
    %v125 = vld [vmem:[#allocation5 + $0x230] sm:$0xff]
    %v126 = vld [vmem:[#allocation5 + $0x238] sm:$0xff]
    %v127 = vld [vmem:[#allocation5 + $0x240] sm:$0xff]
    %v128 = vld [vmem:[#allocation5 + $0x248] sm:$0xff]
    %v129 = vld [vmem:[#allocation5 + $0x250] sm:$0xff]
    %v130 = vld [vmem:[#allocation5 + $0x258] sm:$0xff]
    %v131 = vld [vmem:[#allocation5 + $0x260] sm:$0xff]
    %v132 = vld [vmem:[#allocation5 + $0x268] sm:$0xff]
    %v133 = vld [vmem:[#allocation5 + $0x270] sm:$0xff]
    %v134 = vld [vmem:[#allocation5 + $0x278] sm:$0xff]
    %v135 = vld [vmem:[#allocation5 + $0x280] sm:$0xff]
    %v136 = vld [vmem:[#allocation5 + $0x288] sm:$0xff]
    %v137 = vld [vmem:[#allocation5 + $0x290] sm:$0xff]
    %v138 = vld [vmem:[#allocation5 + $0x298] sm:$0xff]
    %v139 = vld [vmem:[#allocation5 + $0x2a0] sm:$0xff]
    %v140 = vld [vmem:[#allocation5 + $0x2a8] sm:$0xff]
    %v141 = vld [vmem:[#allocation5 + $0x2b0] sm:$0xff]
    %v142 = vld [vmem:[#allocation5 + $0x2b8] sm:$0xff]
    %v143 = vld [vmem:[#allocation5 + $0x2c0] sm:$0xff]
    %v144 = vld [vmem:[#allocation5 + $0x2c8] sm:$0xff]
    %v145 = vld [vmem:[#allocation5 + $0x2d0] sm:$0xff]
    %v146 = vld [vmem:[#allocation5 + $0x2d8] sm:$0xff]
    %v147 = vld [vmem:[#allocation5 + $0x2e0] sm:$0xff]
    %v148 = vld [vmem:[#allocation5 + $0x2e8] sm:$0xff]
    %v149 = vld [vmem:[#allocation5 + $0x2f0] sm:$0xff]
    %v150 = vld [vmem:[#allocation5 + $0x2f8] sm:$0xff]
    %v151 = vld [vmem:[#allocation5 + $0x300] sm:$0xff]
    %v152 = vld [vmem:[#allocation5 + $0x308] sm:$0xff]
    %v153 = vld [vmem:[#allocation5 + $0x310] sm:$0xff]
    %v154 = vld [vmem:[#allocation5 + $0x318] sm:$0xff]
    %v155 = vld [vmem:[#allocation5 + $0x320] sm:$0xff]
    %v156 = vld [vmem:[#allocation5 + $0x328] sm:$0xff]
    %v157 = vld [vmem:[#allocation5 + $0x330] sm:$0xff]
    %v158 = vld [vmem:[#allocation5 + $0x338] sm:$0xff]
    %v159 = vld [vmem:[#allocation5 + $0x340] sm:$0xff]
    %v160 = vld [vmem:[#allocation5 + $0x348] sm:$0xff]
    %v161 = vld [vmem:[#allocation5 + $0x350] sm:$0xff]
    %v162 = vld [vmem:[#allocation5 + $0x358] sm:$0xff]
    %v163 = vld [vmem:[#allocation5 + $0x360] sm:$0xff]
    %v164 = vld [vmem:[#allocation5 + $0x368] sm:$0xff]
    %v165 = vld [vmem:[#allocation5 + $0x370] sm:$0xff]
    %v166 = vld [vmem:[#allocation5 + $0x378] sm:$0xff]
    %v167 = vld [vmem:[#allocation5 + $0x380] sm:$0xff]
    %v168 = vld [vmem:[#allocation5 + $0x388] sm:$0xff]
    %v169 = vld [vmem:[#allocation5 + $0x390] sm:$0xff]
    %v170 = vld [vmem:[#allocation5 + $0x398] sm:$0xff]
    %v171 = vld [vmem:[#allocation5 + $0x3a0] sm:$0xff]
    %v172 = vld [vmem:[#allocation5 + $0x3a8] sm:$0xff]
    %v173 = vld [vmem:[#allocation5 + $0x3b0] sm:$0xff]
    %v174 = vld [vmem:[#allocation5 + $0x3b8] sm:$0xff]
    %v175 = vld [vmem:[#allocation5 + $0x3c0] sm:$0xff]
    %v176 = vld [vmem:[#allocation5 + $0x3c8] sm:$0xff]
    %v177 = vld [vmem:[#allocation5 + $0x3d0] sm:$0xff]
    %v178 = vld [vmem:[#allocation5 + $0x3d8] sm:$0xff]
    %v179 = vld [vmem:[#allocation5 + $0x3e0] sm:$0xff]
    %v180 = vld [vmem:[#allocation5 + $0x3e8] sm:$0xff]
    %v181 = vld [vmem:[#allocation5 + $0x3f0] sm:$0xff]
    %v182 = vld [vmem:[#allocation5 + $0x3f8] sm:$0xff]
    %v183 = vld [vmem:[#allocation5 + $0x400] sm:$0xff]
    %v184 = vld [vmem:[#allocation5 + $0x408] sm:$0xff]
    %v185 = vld [vmem:[#allocation5 + $0x410] sm:$0xff]
    %v186 = vld [vmem:[#allocation5 + $0x418] sm:$0xff]
    %v187 = vld [vmem:[#allocation5 + $0x420] sm:$0xff]
    %v188 = vld [vmem:[#allocation5 + $0x428] sm:$0xff]
    %v189 = vld [vmem:[#allocation5 + $0x430] sm:$0xff]
    %v190 = vld [vmem:[#allocation5 + $0x438] sm:$0xff]
    %v191 = vld [vmem:[#allocation5 + $0x440] sm:$0xff]
    %v192 = vld [vmem:[#allocation5 + $0x448] sm:$0xff]
    %v193 = vld [vmem:[#allocation5 + $0x450] sm:$0xff]
    %v194 = vld [vmem:[#allocation5 + $0x458] sm:$0xff]
    %v195 = vld [vmem:[#allocation5 + $0x460] sm:$0xff]
    %v196 = vld [vmem:[#allocation5 + $0x468] sm:$0xff]
    %v197 = vld [vmem:[#allocation5 + $0x470] sm:$0xff]
    %v198 = vld [vmem:[#allocation5 + $0x478] sm:$0xff]
    %v199 = vld [vmem:[#allocation5 + $0x480] sm:$0xff]
    %v200 = vld [vmem:[#allocation5 + $0x488] sm:$0xff]
    %v201 = vld [vmem:[#allocation5 + $0x490] sm:$0xff]
    %v202 = vld [vmem:[#allocation5 + $0x498] sm:$0xff]
    %v203 = vld [vmem:[#allocation5 + $0x4a0] sm:$0xff]
    %v204 = vld [vmem:[#allocation5 + $0x4a8] sm:$0xff]
    %v205 = vld [vmem:[#allocation5 + $0x4b0] sm:$0xff]
    %v206 = vld [vmem:[#allocation5 + $0x4b8] sm:$0xff]
    %v207 = vld [vmem:[#allocation5 + $0x4c0] sm:$0xff]
    %v208 = vld [vmem:[#allocation5 + $0x4c8] sm:$0xff]
    %v209 = vld [vmem:[#allocation5 + $0x4d0] sm:$0xff]
    %v210 = vld [vmem:[#allocation5 + $0x4d8] sm:$0xff]
    %v211 = vld [vmem:[#allocation5 + $0x4e0] sm:$0xff]
    %v212 = vld [vmem:[#allocation5 + $0x4e8] sm:$0xff]
    %v213 = vld [vmem:[#allocation5 + $0x4f0] sm:$0xff]
    %v214 = vld [vmem:[#allocation5 + $0x4f8] sm:$0xff]
    %v215 = vld [vmem:[#allocation5 + $0x500] sm:$0xff]
    %v216 = vld [vmem:[#allocation5 + $0x508] sm:$0xff]
    %v217 = vld [vmem:[#allocation5 + $0x510] sm:$0xff]
    %v218 = vld [vmem:[#allocation5 + $0x518] sm:$0xff]
    %v219 = vld [vmem:[#allocation5 + $0x520] sm:$0xff]
    %v220 = vld [vmem:[#allocation5 + $0x528] sm:$0xff]
    %v221 = vld [vmem:[#allocation5 + $0x530] sm:$0xff]
    %v222 = vld [vmem:[#allocation5 + $0x538] sm:$0xff]
    %v223 = vld [vmem:[#allocation5 + $0x540] sm:$0xff]
    %v224 = vld [vmem:[#allocation5 + $0x548] sm:$0xff]
    %v225 = vld [vmem:[#allocation5 + $0x550] sm:$0xff]
    %v226 = vld [vmem:[#allocation5 + $0x558] sm:$0xff]
    %v227 = vld [vmem:[#allocation5 + $0x560] sm:$0xff]
    %v228 = vld [vmem:[#allocation5 + $0x568] sm:$0xff]
    %v229 = vld [vmem:[#allocation5 + $0x570] sm:$0xff]
    %v230 = vld [vmem:[#allocation5 + $0x578] sm:$0xff]
    %v231 = vld [vmem:[#allocation5 + $0x580] sm:$0xff]
    %v232 = vld [vmem:[#allocation5 + $0x588] sm:$0xff]
    %v233 = vld [vmem:[#allocation5 + $0x590] sm:$0xff]
    %v234 = vld [vmem:[#allocation5 + $0x598] sm:$0xff]
    %v235 = vld [vmem:[#allocation5 + $0x5a0] sm:$0xff]
    %v236 = vld [vmem:[#allocation5 + $0x5a8] sm:$0xff]
    %v237 = vld [vmem:[#allocation5 + $0x5b0] sm:$0xff]
    %v238 = vld [vmem:[#allocation5 + $0x5b8] sm:$0xff]
    %v239 = vld [vmem:[#allocation5 + $0x5c0] sm:$0xff]
    %v240 = vld [vmem:[#allocation5 + $0x5c8] sm:$0xff]
    %v241 = vld [vmem:[#allocation5 + $0x5d0] sm:$0xff]
    %v242 = vld [vmem:[#allocation5 + $0x5d8] sm:$0xff]
    %v243 = vld [vmem:[#allocation5 + $0x5e0] sm:$0xff]
    %v244 = vld [vmem:[#allocation5 + $0x5e8] sm:$0xff]
    %v245 = vld [vmem:[#allocation5 + $0x5f0] sm:$0xff]
    %v246 = vld [vmem:[#allocation5 + $0x5f8] sm:$0xff]
    %v247 = vld [vmem:[#allocation5 + $0x600] sm:$0xff]
    %v248 = vld [vmem:[#allocation5 + $0x608] sm:$0xff]
    %v249 = vld [vmem:[#allocation5 + $0x610] sm:$0xff]
    %v250 = vld [vmem:[#allocation5 + $0x618] sm:$0xff]
    %v251 = vld [vmem:[#allocation5 + $0x620] sm:$0xff]
    %v252 = vld [vmem:[#allocation5 + $0x628] sm:$0xff]
    %v253 = vld [vmem:[#allocation5 + $0x630] sm:$0xff]
    %v254 = vld [vmem:[#allocation5 + $0x638] sm:$0xff]
    %v255 = vld [vmem:[#allocation5 + $0x640] sm:$0xff]
    %v256 = vld [vmem:[#allocation5 + $0x648] sm:$0xff]
    %v257 = vld [vmem:[#allocation5 + $0x650] sm:$0xff]
    %v258 = vld [vmem:[#allocation5 + $0x658] sm:$0xff]
    %v259 = vld [vmem:[#allocation5 + $0x660] sm:$0xff]
    %v260 = vld [vmem:[#allocation5 + $0x668] sm:$0xff]
    %v261 = vld [vmem:[#allocation5 + $0x670] sm:$0xff]
    %v262 = vld [vmem:[#allocation5 + $0x678] sm:$0xff]
    %v263 = vld [vmem:[#allocation5 + $0x680] sm:$0xff]
    %v264 = vld [vmem:[#allocation5 + $0x688] sm:$0xff]
    %v265 = vld [vmem:[#allocation5 + $0x690] sm:$0xff]
    %v266 = vld [vmem:[#allocation5 + $0x698] sm:$0xff]
    %v267 = vld [vmem:[#allocation5 + $0x6a0] sm:$0xff]
    %v268 = vld [vmem:[#allocation5 + $0x6a8] sm:$0xff]
    %v269 = vld [vmem:[#allocation5 + $0x6b0] sm:$0xff]
    %v270 = vld [vmem:[#allocation5 + $0x6b8] sm:$0xff]
    %v271 = vld [vmem:[#allocation5 + $0x6c0] sm:$0xff]
    %v272 = vld [vmem:[#allocation5 + $0x6c8] sm:$0xff]
    %v273 = vld [vmem:[#allocation5 + $0x6d0] sm:$0xff]
    %v274 = vld [vmem:[#allocation5 + $0x6d8] sm:$0xff]
    %v275 = vld [vmem:[#allocation5 + $0x6e0] sm:$0xff]
    %v276 = vld [vmem:[#allocation5 + $0x6e8] sm:$0xff]
    %v277 = vld [vmem:[#allocation5 + $0x6f0] sm:$0xff]
    %v278 = vld [vmem:[#allocation5 + $0x6f8] sm:$0xff]
    %v279 = vld [vmem:[#allocation5 + $0x700] sm:$0xff]
    %v280 = vld [vmem:[#allocation5 + $0x708] sm:$0xff]
    %v281 = vld [vmem:[#allocation5 + $0x710] sm:$0xff]
    %v282 = vld [vmem:[#allocation5 + $0x718] sm:$0xff]
    %v283 = vld [vmem:[#allocation5 + $0x720] sm:$0xff]
    %v284 = vld [vmem:[#allocation5 + $0x728] sm:$0xff]
    %v285 = vld [vmem:[#allocation5 + $0x730] sm:$0xff]
    %v286 = vld [vmem:[#allocation5 + $0x738] sm:$0xff]
    %v287 = vld [vmem:[#allocation5 + $0x740] sm:$0xff]
    %v288 = vld [vmem:[#allocation5 + $0x748] sm:$0xff]
    %v289 = vld [vmem:[#allocation5 + $0x750] sm:$0xff]
    %v290 = vld [vmem:[#allocation5 + $0x758] sm:$0xff]
    %v291 = vld [vmem:[#allocation5 + $0x760] sm:$0xff]
    %v292 = vld [vmem:[#allocation5 + $0x768] sm:$0xff]
    %v293 = vld [vmem:[#allocation5 + $0x770] sm:$0xff]
    %v294 = vld [vmem:[#allocation5 + $0x778] sm:$0xff]
    %v295 = vld [vmem:[#allocation5 + $0x780] sm:$0xff]
    %v296 = vld [vmem:[#allocation5 + $0x788] sm:$0xff]
    %v297 = vld [vmem:[#allocation5 + $0x790] sm:$0xff]
    %v298 = vld [vmem:[#allocation5 + $0x798] sm:$0xff]
    %v299 = vld [vmem:[#allocation5 + $0x7a0] sm:$0xff]
    %v300 = vld [vmem:[#allocation5 + $0x7a8] sm:$0xff]
    %v301 = vld [vmem:[#allocation5 + $0x7b0] sm:$0xff]
    %v302 = vld [vmem:[#allocation5 + $0x7b8] sm:$0xff]
    %v303 = vld [vmem:[#allocation5 + $0x7c0] sm:$0xff]
    %v304 = vld [vmem:[#allocation5 + $0x7c8] sm:$0xff]
    %v305 = vld [vmem:[#allocation5 + $0x7d0] sm:$0xff]
    %v306 = vld [vmem:[#allocation5 + $0x7d8] sm:$0xff]
    %v307 = vld [vmem:[#allocation5 + $0x7e0] sm:$0xff]
    %v308 = vld [vmem:[#allocation5 + $0x7e8] sm:$0xff]
    %v309 = vld [vmem:[#allocation5 + $0x7f0] sm:$0xff]
    %v310 = vld [vmem:[#allocation5 + $0x7f8] sm:$0xff]
    %v311 = vld [vmem:[#allocation5 + $0x800] sm:$0xff]
    %v312 = vld [vmem:[#allocation5 + $0x808] sm:$0xff]
    %v313 = vld [vmem:[#allocation5 + $0x810] sm:$0xff]
    %v314 = vld [vmem:[#allocation5 + $0x818] sm:$0xff]
    %v315 = vld [vmem:[#allocation5 + $0x820] sm:$0xff]
    %v316 = vld [vmem:[#allocation5 + $0x828] sm:$0xff]
    %v317 = vld [vmem:[#allocation5 + $0x830] sm:$0xff]
    %v318 = vld [vmem:[#allocation5 + $0x838] sm:$0xff]
    %v319 = vld [vmem:[#allocation5 + $0x840] sm:$0xff]
    %v320 = vld [vmem:[#allocation5 + $0x848] sm:$0xff]
    %v321 = vld [vmem:[#allocation5 + $0x850] sm:$0xff]
    %v322 = vld [vmem:[#allocation5 + $0x858] sm:$0xff]
    %v323 = vld [vmem:[#allocation5 + $0x860] sm:$0xff]
    %v324 = vld [vmem:[#allocation5 + $0x868] sm:$0xff]
    %v325 = vld [vmem:[#allocation5 + $0x870] sm:$0xff]
    %v326 = vld [vmem:[#allocation5 + $0x878] sm:$0xff]
    %v327 = vld [vmem:[#allocation5 + $0x880] sm:$0xff]
    %v328 = vld [vmem:[#allocation5 + $0x888] sm:$0xff]
    %v329 = vld [vmem:[#allocation5 + $0x890] sm:$0xff]
    %v330 = vld [vmem:[#allocation5 + $0x898] sm:$0xff]
    %v331 = vld [vmem:[#allocation5 + $0x8a0] sm:$0xff]
    %v332 = vld [vmem:[#allocation5 + $0x8a8] sm:$0xff]
    %v333 = vld [vmem:[#allocation5 + $0x8b0] sm:$0xff]
    %v334 = vld [vmem:[#allocation5 + $0x8b8] sm:$0xff]
    %v335 = vld [vmem:[#allocation5 + $0x8c0] sm:$0xff]
    %v336 = vld [vmem:[#allocation5 + $0x8c8] sm:$0xff]
    %v337 = vld [vmem:[#allocation5 + $0x8d0] sm:$0xff]
    %v338 = vld [vmem:[#allocation5 + $0x8d8] sm:$0xff]
    %v339 = vld [vmem:[#allocation5 + $0x8e0] sm:$0xff]
    %v340 = vld [vmem:[#allocation5 + $0x8e8] sm:$0xff]
    %v341 = vld [vmem:[#allocation5 + $0x8f0] sm:$0xff]
    %v342 = vld [vmem:[#allocation5 + $0x8f8] sm:$0xff]
    %v343 = vld [vmem:[#allocation5 + $0x900] sm:$0xff]
    %v344 = vld [vmem:[#allocation5 + $0x908] sm:$0xff]
    %v345 = vld [vmem:[#allocation5 + $0x910] sm:$0xff]
    %v346 = vld [vmem:[#allocation5 + $0x918] sm:$0xff]
    %v347 = vld [vmem:[#allocation5 + $0x920] sm:$0xff]
    %v348 = vld [vmem:[#allocation5 + $0x928] sm:$0xff]
    %v349 = vld [vmem:[#allocation5 + $0x930] sm:$0xff]
    %v350 = vld [vmem:[#allocation5 + $0x938] sm:$0xff]
    %v351 = vld [vmem:[#allocation5 + $0x940] sm:$0xff]
    %v352 = vld [vmem:[#allocation5 + $0x948] sm:$0xff]
    %v353 = vld [vmem:[#allocation5 + $0x950] sm:$0xff]
    %v354 = vld [vmem:[#allocation5 + $0x958] sm:$0xff]
    %v355 = vld [vmem:[#allocation5 + $0x960] sm:$0xff]
    %v356 = vld [vmem:[#allocation5 + $0x968] sm:$0xff]
    %v357 = vld [vmem:[#allocation5 + $0x970] sm:$0xff]
    %v358 = vld [vmem:[#allocation5 + $0x978] sm:$0xff]
    %v359 = vld [vmem:[#allocation5 + $0x980] sm:$0xff]
    %v360 = vld [vmem:[#allocation5 + $0x988] sm:$0xff]
    %v361 = vld [vmem:[#allocation5 + $0x990] sm:$0xff]
    %v362 = vld [vmem:[#allocation5 + $0x998] sm:$0xff]
    %v363 = vld [vmem:[#allocation5 + $0x9a0] sm:$0xff]
    %v364 = vld [vmem:[#allocation5 + $0x9a8] sm:$0xff]
    %v365 = vld [vmem:[#allocation5 + $0x9b0] sm:$0xff]
    %v366 = vld [vmem:[#allocation5 + $0x9b8] sm:$0xff]
    %v367 = vld [vmem:[#allocation5 + $0x9c0] sm:$0xff]
    %v368 = vld [vmem:[#allocation5 + $0x9c8] sm:$0xff]
    %v369 = vld [vmem:[#allocation5 + $0x9d0] sm:$0xff]
    %v370 = vld [vmem:[#allocation5 + $0x9d8] sm:$0xff]
    %v371 = vld [vmem:[#allocation5 + $0x9e0] sm:$0xff]
    %v372 = vld [vmem:[#allocation5 + $0x9e8] sm:$0xff]
    %v373 = vld [vmem:[#allocation5 + $0x9f0] sm:$0xff]
    %v374 = vld [vmem:[#allocation5 + $0x9f8] sm:$0xff]
    %v375 = vld [vmem:[#allocation5 + $0xa00] sm:$0xff]
    %v376 = vld [vmem:[#allocation5 + $0xa08] sm:$0xff]
    %v377 = vld [vmem:[#allocation5 + $0xa10] sm:$0xff]
    %v378 = vld [vmem:[#allocation5 + $0xa18] sm:$0xff]
    %v379 = vld [vmem:[#allocation5 + $0xa20] sm:$0xff]
    %v380 = vld [vmem:[#allocation5 + $0xa28] sm:$0xff]
    %v381 = vld [vmem:[#allocation5 + $0xa30] sm:$0xff]
    %v382 = vld [vmem:[#allocation5 + $0xa38] sm:$0xff]
    %v383 = vld [vmem:[#allocation5 + $0xa40] sm:$0xff]
    %v384 = vld [vmem:[#allocation5 + $0xa48] sm:$0xff]
    %v385 = vld [vmem:[#allocation5 + $0xa50] sm:$0xff]
    %v386 = vld [vmem:[#allocation5 + $0xa58] sm:$0xff]
    %v387 = vld [vmem:[#allocation5 + $0xa60] sm:$0xff]
    %v388 = vld [vmem:[#allocation5 + $0xa68] sm:$0xff]
    %v389 = vld [vmem:[#allocation5 + $0xa70] sm:$0xff]
    %v390 = vld [vmem:[#allocation5 + $0xa78] sm:$0xff]
    %v391 = vld [vmem:[#allocation5 + $0xa80] sm:$0xff]
    %v392 = vld [vmem:[#allocation5 + $0xa88] sm:$0xff]
    %v393 = vld [vmem:[#allocation5 + $0xa90] sm:$0xff]
    %v394 = vld [vmem:[#allocation5 + $0xa98] sm:$0xff]
    %v395 = vld [vmem:[#allocation5 + $0xaa0] sm:$0xff]
    %v396 = vld [vmem:[#allocation5 + $0xaa8] sm:$0xff]
    %v397 = vld [vmem:[#allocation5 + $0xab0] sm:$0xff]
    %v398 = vld [vmem:[#allocation5 + $0xab8] sm:$0xff]
    %v399 = vld [vmem:[#allocation5 + $0xac0] sm:$0xff]
    %v400 = vld [vmem:[#allocation5 + $0xac8] sm:$0xff]
    %v401 = vld [vmem:[#allocation5 + $0xad0] sm:$0xff]
    %v402 = vld [vmem:[#allocation5 + $0xad8] sm:$0xff]
    %v403 = vld [vmem:[#allocation5 + $0xae0] sm:$0xff]
    %v404 = vld [vmem:[#allocation5 + $0xae8] sm:$0xff]
    %v405 = vld [vmem:[#allocation5 + $0xaf0] sm:$0xff]
    %v406 = vld [vmem:[#allocation5 + $0xaf8] sm:$0xff]
    %v407 = vld [vmem:[#allocation5 + $0xb00] sm:$0xff]
    %v408 = vld [vmem:[#allocation5 + $0xb08] sm:$0xff]
    %v409 = vld [vmem:[#allocation5 + $0xb10] sm:$0xff]
    %v410 = vld [vmem:[#allocation5 + $0xb18] sm:$0xff]
    %v411 = vld [vmem:[#allocation5 + $0xb20] sm:$0xff]
    %v412 = vld [vmem:[#allocation5 + $0xb28] sm:$0xff]
    %v413 = vld [vmem:[#allocation5 + $0xb30] sm:$0xff]
    %v414 = vld [vmem:[#allocation5 + $0xb38] sm:$0xff]
    %v415 = vld [vmem:[#allocation5 + $0xb40] sm:$0xff]
    %v416 = vld [vmem:[#allocation5 + $0xb48] sm:$0xff]
    %v417 = vld [vmem:[#allocation5 + $0xb50] sm:$0xff]
    %v418 = vld [vmem:[#allocation5 + $0xb58] sm:$0xff]
    %v419 = vld [vmem:[#allocation5 + $0xb60] sm:$0xff]
    %v420 = vld [vmem:[#allocation5 + $0xb68] sm:$0xff]
    %v421 = vld [vmem:[#allocation5 + $0xb70] sm:$0xff]
    %v422 = vld [vmem:[#allocation5 + $0xb78] sm:$0xff]
    %v423 = vld [vmem:[#allocation5 + $0xb80] sm:$0xff]
    %v424 = vld [vmem:[#allocation5 + $0xb88] sm:$0xff]
    %v425 = vld [vmem:[#allocation5 + $0xb90] sm:$0xff]
    %v426 = vld [vmem:[#allocation5 + $0xb98] sm:$0xff]
    %v427 = vld [vmem:[#allocation5 + $0xba0] sm:$0xff]
    %v428 = vld [vmem:[#allocation5 + $0xba8] sm:$0xff]
    %v429 = vld [vmem:[#allocation5 + $0xbb0] sm:$0xff]
    %v430 = vld [vmem:[#allocation5 + $0xbb8] sm:$0xff]
    %v431 = vld [vmem:[#allocation5 + $0xbc0] sm:$0xff]
    %v432 = vld [vmem:[#allocation5 + $0xbc8] sm:$0xff]
    %v433 = vld [vmem:[#allocation5 + $0xbd0] sm:$0xff]
    %v434 = vld [vmem:[#allocation5 + $0xbd8] sm:$0xff]
    %v435 = vld [vmem:[#allocation5 + $0xbe0] sm:$0xff]
    %v436 = vld [vmem:[#allocation5 + $0xbe8] sm:$0xff]
    %v437 = vld [vmem:[#allocation5 + $0xbf0] sm:$0xff]
    %v438 = vld [vmem:[#allocation5 + $0xbf8] sm:$0xff]
    %v439 = vld [vmem:[#allocation5 + $0xc00] sm:$0xff]
    %v440 = vld [vmem:[#allocation5 + $0xc08] sm:$0xff]
    %v441 = vld [vmem:[#allocation5 + $0xc10] sm:$0xff]
    %v442 = vld [vmem:[#allocation5 + $0xc18] sm:$0xff]
    %v443 = vld [vmem:[#allocation5 + $0xc20] sm:$0xff]
    %v444 = vld [vmem:[#allocation5 + $0xc28] sm:$0xff]
    %v445 = vld [vmem:[#allocation5 + $0xc30] sm:$0xff]
    %v446 = vld [vmem:[#allocation5 + $0xc38] sm:$0xff]
    %v447 = vld [vmem:[#allocation5 + $0xc40] sm:$0xff]
    %v448 = vld [vmem:[#allocation5 + $0xc48] sm:$0xff]
    %v449 = vld [vmem:[#allocation5 + $0xc50] sm:$0xff]
    %v450 = vld [vmem:[#allocation5 + $0xc58] sm:$0xff]
    %v451 = vld [vmem:[#allocation5 + $0xc60] sm:$0xff]
    %v452 = vld [vmem:[#allocation5 + $0xc68] sm:$0xff]
    %v453 = vld [vmem:[#allocation5 + $0xc70] sm:$0xff]
    %v454 = vld [vmem:[#allocation5 + $0xc78] sm:$0xff]
    %v455 = vld [vmem:[#allocation5 + $0xc80] sm:$0xff]
    %v456 = vld [vmem:[#allocation5 + $0xc88] sm:$0xff]
    %v457 = vld [vmem:[#allocation5 + $0xc90] sm:$0xff]
    %v458 = vld [vmem:[#allocation5 + $0xc98] sm:$0xff]
    %v459 = vld [vmem:[#allocation5 + $0xca0] sm:$0xff]
    %v460 = vld [vmem:[#allocation5 + $0xca8] sm:$0xff]
    %v461 = vld [vmem:[#allocation5 + $0xcb0] sm:$0xff]
    %v462 = vld [vmem:[#allocation5 + $0xcb8] sm:$0xff]
    %v463 = vld [vmem:[#allocation5 + $0xcc0] sm:$0xff]
    %v464 = vld [vmem:[#allocation5 + $0xcc8] sm:$0xff]
    %v465 = vld [vmem:[#allocation5 + $0xcd0] sm:$0xff]
    %v466 = vld [vmem:[#allocation5 + $0xcd8] sm:$0xff]
    %v467 = vld [vmem:[#allocation5 + $0xce0] sm:$0xff]
    %v468 = vld [vmem:[#allocation5 + $0xce8] sm:$0xff]
    %v469 = vld [vmem:[#allocation5 + $0xcf0] sm:$0xff]
    %v470 = vld [vmem:[#allocation5 + $0xcf8] sm:$0xff]
    %v471 = vld [vmem:[#allocation5 + $0xd00] sm:$0xff]
    %v472 = vld [vmem:[#allocation5 + $0xd08] sm:$0xff]
    %v473 = vld [vmem:[#allocation5 + $0xd10] sm:$0xff]
    %v474 = vld [vmem:[#allocation5 + $0xd18] sm:$0xff]
    %v475 = vld [vmem:[#allocation5 + $0xd20] sm:$0xff]
    %v476 = vld [vmem:[#allocation5 + $0xd28] sm:$0xff]
    %v477 = vld [vmem:[#allocation5 + $0xd30] sm:$0xff]
    %v478 = vld [vmem:[#allocation5 + $0xd38] sm:$0xff]
    %v479 = vld [vmem:[#allocation5 + $0xd40] sm:$0xff]
    %v480 = vld [vmem:[#allocation5 + $0xd48] sm:$0xff]
    %v481 = vld [vmem:[#allocation5 + $0xd50] sm:$0xff]
    %v482 = vld [vmem:[#allocation5 + $0xd58] sm:$0xff]
    %v483 = vld [vmem:[#allocation5 + $0xd60] sm:$0xff]
    %v484 = vld [vmem:[#allocation5 + $0xd68] sm:$0xff]
    %v485 = vld [vmem:[#allocation5 + $0xd70] sm:$0xff]
    %v486 = vld [vmem:[#allocation5 + $0xd78] sm:$0xff]
    %v487 = vld [vmem:[#allocation5 + $0xd80] sm:$0xff]
    %v488 = vld [vmem:[#allocation5 + $0xd88] sm:$0xff]
    %v489 = vld [vmem:[#allocation5 + $0xd90] sm:$0xff]
    %v490 = vld [vmem:[#allocation5 + $0xd98] sm:$0xff]
    %v491 = vld [vmem:[#allocation5 + $0xda0] sm:$0xff]
    %v492 = vld [vmem:[#allocation5 + $0xda8] sm:$0xff]
    %v493 = vld [vmem:[#allocation5 + $0xdb0] sm:$0xff]
    %v494 = vld [vmem:[#allocation5 + $0xdb8] sm:$0xff]
    %v495 = vld [vmem:[#allocation5 + $0xdc0] sm:$0xff]
    %v496 = vld [vmem:[#allocation5 + $0xdc8] sm:$0xff]
    %v497 = vld [vmem:[#allocation5 + $0xdd0] sm:$0xff]
    %v498 = vld [vmem:[#allocation5 + $0xdd8] sm:$0xff]
    %v499 = vld [vmem:[#allocation5 + $0xde0] sm:$0xff]
    %v500 = vld [vmem:[#allocation5 + $0xde8] sm:$0xff]
    %v501 = vld [vmem:[#allocation5 + $0xdf0] sm:$0xff]
    %v502 = vld [vmem:[#allocation5 + $0xdf8] sm:$0xff]
    %v503 = vld [vmem:[#allocation5 + $0xe00] sm:$0xff]
    %v504 = vld [vmem:[#allocation5 + $0xe08] sm:$0xff]
    %v505 = vld [vmem:[#allocation5 + $0xe10] sm:$0xff]
    %v506 = vld [vmem:[#allocation5 + $0xe18] sm:$0xff]
    %v507 = vld [vmem:[#allocation5 + $0xe20] sm:$0xff]
    %v508 = vld [vmem:[#allocation5 + $0xe28] sm:$0xff]
    %v509 = vld [vmem:[#allocation5 + $0xe30] sm:$0xff]
    %v510 = vld [vmem:[#allocation5 + $0xe38] sm:$0xff]
    %v511 = vld [vmem:[#allocation5 + $0xe40] sm:$0xff]
    %v512 = vld [vmem:[#allocation5 + $0xe48] sm:$0xff]
    %v513 = vld [vmem:[#allocation5 + $0xe50] sm:$0xff]
    %v514 = vld [vmem:[#allocation5 + $0xe58] sm:$0xff]
    %v515 = vld [vmem:[#allocation5 + $0xe60] sm:$0xff]
    %v516 = vld [vmem:[#allocation5 + $0xe68] sm:$0xff]
    %v517 = vld [vmem:[#allocation5 + $0xe70] sm:$0xff]
    %v518 = vld [vmem:[#allocation5 + $0xe78] sm:$0xff]
    %v519 = vld [vmem:[#allocation5 + $0xe80] sm:$0xff]
    %v520 = vld [vmem:[#allocation5 + $0xe88] sm:$0xff]
    %v521 = vld [vmem:[#allocation5 + $0xe90] sm:$0xff]
    %v522 = vld [vmem:[#allocation5 + $0xe98] sm:$0xff]
    %v523 = vld [vmem:[#allocation5 + $0xea0] sm:$0xff]
    %v524 = vld [vmem:[#allocation5 + $0xea8] sm:$0xff]
    %v525 = vld [vmem:[#allocation5 + $0xeb0] sm:$0xff]
    %v526 = vld [vmem:[#allocation5 + $0xeb8] sm:$0xff]
    %v527 = vld [vmem:[#allocation5 + $0xec0] sm:$0xff]
    %v528 = vld [vmem:[#allocation5 + $0xec8] sm:$0xff]
    %v529 = vld [vmem:[#allocation5 + $0xed0] sm:$0xff]
    %v530 = vld [vmem:[#allocation5 + $0xed8] sm:$0xff]
    %v531 = vld [vmem:[#allocation5 + $0xee0] sm:$0xff]
    %v532 = vld [vmem:[#allocation5 + $0xee8] sm:$0xff]
    %v533 = vld [vmem:[#allocation5 + $0xef0] sm:$0xff]
    %v534 = vld [vmem:[#allocation5 + $0xef8] sm:$0xff]
    %v535 = vld [vmem:[#allocation5 + $0xf00] sm:$0xff]
    %v536 = vld [vmem:[#allocation5 + $0xf08] sm:$0xff]
    %v537 = vld [vmem:[#allocation5 + $0xf10] sm:$0xff]
    %v538 = vld [vmem:[#allocation5 + $0xf18] sm:$0xff]
    %v539 = vld [vmem:[#allocation5 + $0xf20] sm:$0xff]
    %v540 = vld [vmem:[#allocation5 + $0xf28] sm:$0xff]
    %v541 = vld [vmem:[#allocation5 + $0xf30] sm:$0xff]
    %v542 = vld [vmem:[#allocation5 + $0xf38] sm:$0xff]
    %v543 = vld [vmem:[#allocation5 + $0xf40] sm:$0xff]
    %v544 = vld [vmem:[#allocation5 + $0xf48] sm:$0xff]
    %v545 = vld [vmem:[#allocation5 + $0xf50] sm:$0xff]
    %v546 = vld [vmem:[#allocation5 + $0xf58] sm:$0xff]
    %v547 = vld [vmem:[#allocation5 + $0xf60] sm:$0xff]
    %v548 = vld [vmem:[#allocation5 + $0xf68] sm:$0xff]
    %v549 = vld [vmem:[#allocation5 + $0xf70] sm:$0xff]
    %v550 = vld [vmem:[#allocation5 + $0xf78] sm:$0xff]
    %v551 = vld [vmem:[#allocation5 + $0xf80] sm:$0xff]
    %v552 = vld [vmem:[#allocation5 + $0xf88] sm:$0xff]
    %v553 = vld [vmem:[#allocation5 + $0xf90] sm:$0xff]
    %v554 = vld [vmem:[#allocation5 + $0xf98] sm:$0xff]
    %v555 = vld [vmem:[#allocation5 + $0xfa0] sm:$0xff]
    %v556 = vld [vmem:[#allocation5 + $0xfa8] sm:$0xff]
    %v557 = vld [vmem:[#allocation5 + $0xfb0] sm:$0xff]
    %v558 = vld [vmem:[#allocation5 + $0xfb8] sm:$0xff]
    %v559 = vld [vmem:[#allocation5 + $0xfc0] sm:$0xff]
    %v560 = vld [vmem:[#allocation5 + $0xfc8] sm:$0xff]
    %v561 = vld [vmem:[#allocation5 + $0xfd0] sm:$0xff]
    %v562 = vld [vmem:[#allocation5 + $0xfd8] sm:$0xff]
    %v563 = vld [vmem:[#allocation5 + $0xfe0] sm:$0xff]
    %v564 = vld [vmem:[#allocation5 + $0xfe8] sm:$0xff]
    %v565 = vld [vmem:[#allocation5 + $0xff0] sm:$0xff]
    %v566 = vld [vmem:[#allocation5 + $0xff8] sm:$0xff]
    %v567 = vld [vmem:[#allocation5 + $0x1000] sm:$0xff]
    %v568 = vld [vmem:[#allocation5 + $0x1008] sm:$0xff]
    %v569 = vld [vmem:[#allocation5 + $0x1010] sm:$0xff]
    %v570 = vld [vmem:[#allocation5 + $0x1018] sm:$0xff]
    %v571 = vld [vmem:[#allocation5 + $0x1020] sm:$0xff]
    %v572 = vld [vmem:[#allocation5 + $0x1028] sm:$0xff]
    %v573 = vld [vmem:[#allocation5 + $0x1030] sm:$0xff]
    %v574 = vld [vmem:[#allocation5 + $0x1038] sm:$0xff]
    %v575 = vld [vmem:[#allocation5 + $0x1040] sm:$0xff]
    %v576 = vld [vmem:[#allocation5 + $0x1048] sm:$0xff]
    %v577 = vld [vmem:[#allocation5 + $0x1050] sm:$0xff]
    %v578 = vld [vmem:[#allocation5 + $0x1058] sm:$0xff]
    %v579 = vld [vmem:[#allocation5 + $0x1060] sm:$0xff]
    %v580 = vld [vmem:[#allocation5 + $0x1068] sm:$0xff]
    %v581 = vld [vmem:[#allocation5 + $0x1070] sm:$0xff]
    %v582 = vld [vmem:[#allocation5 + $0x1078] sm:$0xff]
    %v583 = vld [vmem:[#allocation5 + $0x1080] sm:$0xff]
    %v584 = vld [vmem:[#allocation5 + $0x1088] sm:$0xff]
    %v585 = vld [vmem:[#allocation5 + $0x1090] sm:$0xff]
    %v586 = vld [vmem:[#allocation5 + $0x1098] sm:$0xff]
    %v587 = vld [vmem:[#allocation5 + $0x10a0] sm:$0xff]
    %v588 = vld [vmem:[#allocation5 + $0x10a8] sm:$0xff]
    %v589 = vld [vmem:[#allocation5 + $0x10b0] sm:$0xff]
    %v590 = vld [vmem:[#allocation5 + $0x10b8] sm:$0xff]
    %v591 = vld [vmem:[#allocation5 + $0x10c0] sm:$0xff]
    %v592 = vld [vmem:[#allocation5 + $0x10c8] sm:$0xff]
    %v593 = vld [vmem:[#allocation5 + $0x10d0] sm:$0xff]
    %v594 = vld [vmem:[#allocation5 + $0x10d8] sm:$0xff]
    %v595 = vld [vmem:[#allocation5 + $0x10e0] sm:$0xff]
    %v596 = vld [vmem:[#allocation5 + $0x10e8] sm:$0xff]
    %v597 = vld [vmem:[#allocation5 + $0x10f0] sm:$0xff]
    %v598 = vld [vmem:[#allocation5 + $0x10f8] sm:$0xff]
    %v599 = vld [vmem:[#allocation5 + $0x1100] sm:$0xff]
    %v600 = vld [vmem:[#allocation5 + $0x1108] sm:$0xff]
    %v601 = vld [vmem:[#allocation5 + $0x1110] sm:$0xff]
    %v602 = vld [vmem:[#allocation5 + $0x1118] sm:$0xff]
    %v603 = vld [vmem:[#allocation5 + $0x1120] sm:$0xff]
    %v604 = vld [vmem:[#allocation5 + $0x1128] sm:$0xff]
    %v605 = vld [vmem:[#allocation5 + $0x1130] sm:$0xff]
    %v606 = vld [vmem:[#allocation5 + $0x1138] sm:$0xff]
    %v607 = vld [vmem:[#allocation5 + $0x1140] sm:$0xff]
    %v608 = vld [vmem:[#allocation5 + $0x1148] sm:$0xff]
    %v609 = vld [vmem:[#allocation5 + $0x1150] sm:$0xff]
    %v610 = vld [vmem:[#allocation5 + $0x1158] sm:$0xff]
    %v611 = vld [vmem:[#allocation5 + $0x1160] sm:$0xff]
    %v612 = vld [vmem:[#allocation5 + $0x1168] sm:$0xff]
    %v613 = vld [vmem:[#allocation5 + $0x1170] sm:$0xff]
    %v614 = vld [vmem:[#allocation5 + $0x1178] sm:$0xff]
    %v615 = vld [vmem:[#allocation5 + $0x1180] sm:$0xff]
    %v616 = vld [vmem:[#allocation5 + $0x1188] sm:$0xff]
    %v617 = vld [vmem:[#allocation5 + $0x1190] sm:$0xff]
    %v618 = vld [vmem:[#allocation5 + $0x1198] sm:$0xff]
    %v619 = vld [vmem:[#allocation5 + $0x11a0] sm:$0xff]
    %v620 = vld [vmem:[#allocation5 + $0x11a8] sm:$0xff]
    %v621 = vld [vmem:[#allocation5 + $0x11b0] sm:$0xff]
    %v622 = vld [vmem:[#allocation5 + $0x11b8] sm:$0xff]
    %v623 = vld [vmem:[#allocation5 + $0x11c0] sm:$0xff]
    %v624 = vld [vmem:[#allocation5 + $0x11c8] sm:$0xff]
    %v625 = vld [vmem:[#allocation5 + $0x11d0] sm:$0xff]
    %v626 = vld [vmem:[#allocation5 + $0x11d8] sm:$0xff]
    %v627 = vld [vmem:[#allocation5 + $0x11e0] sm:$0xff]
    %v628 = vld [vmem:[#allocation5 + $0x11e8] sm:$0xff]
    %v629 = vld [vmem:[#allocation5 + $0x11f0] sm:$0xff]
    %v630 = vld [vmem:[#allocation5 + $0x11f8] sm:$0xff]
    %v631 = vld [vmem:[%s2] sm:$0x3f]
    %v633 = vlaneseq
    %v634 = vshrl.u32 %v633, 7
    %v635 = vsub.s32 0, %v634
    %v636 = vrot.slane %v631, %v635
    %v637 = vlaneseq
    %v638 = vshrl.u32 %v637, 7
    %v639 = vsub.s32 1, %v638
    %v640 = vrot.slane %v631, %v639
    %v641 = vlaneseq
    %v642 = vshrl.u32 %v641, 7
    %v643 = vsub.s32 2, %v642
    %v644 = vrot.slane %v631, %v643
    %v645 = vlaneseq
    %v646 = vshrl.u32 %v645, 7
    %v647 = vsub.s32 3, %v646
    %v648 = vrot.slane %v631, %v647
    %v649 = vlaneseq
    %v650 = vshrl.u32 %v649, 7
    %v651 = vsub.s32 4, %v650
    %v652 = vrot.slane %v631, %v651
    %v653 = vlaneseq
    %v654 = vshrl.u32 %v653, 7
    %v655 = vsub.s32 5, %v654
    %v656 = vrot.slane %v631, %v655
    %663 = vmatprep.subr.mxu0 %v146
    %664 = vmatpush1.xpose.msra.mxu0 %v145
    %665 = vmatprep.subr.mxu0 %v140
    %666 = vmatpush1.xpose.msra.mxu0 %v139
    %667 = vmatprep.subr.mxu0 %v134
    %668 = vmatpush1.xpose.msra.mxu0 %v133
    %669 = vmatprep.subr.mxu0 %v128
    %670 = vmatpush1.xpose.msra.mxu0 %v127
    %671 = vmatprep.subr.mxu0 %v122
    %672 = vmatpush1.xpose.msra.mxu0 %v121
    %673 = vmatprep.subr.mxu0 %v116
    %674 = vmatpush1.xpose.msra.mxu0 %v115
    %675 = vmatprep.subr.mxu0 %v110
    %676 = vmatpush1.xpose.msra.mxu0 %v109
    %677 = vmatprep.subr.mxu0 %v104
    %678 = vmatpush1.xpose.msra.mxu0 %v103
    %679 = vmatprep.subr.mxu0 %v98
    %680 = vmatpush1.xpose.msra.mxu0 %v97
    %681 = vmatprep.subr.mxu0 %v92
    %682 = vmatpush1.xpose.msra.mxu0 %v91
    %683 = vmatprep.subr.mxu0 %v86
    %684 = vmatpush1.xpose.msra.mxu0 %v85
    %685 = vmatprep.subr.mxu0 %v80
    %686 = vmatpush1.xpose.msra.mxu0 %v79
    %687 = vmatprep.subr.mxu0 %v74
    %688 = vmatpush1.xpose.msra.mxu0 %v73
    %689 = vmatprep.subr.mxu0 %v68
    %690 = vmatpush1.xpose.msra.mxu0 %v67
    %691 = vmatprep.subr.mxu0 %v62
    %692 = vmatpush1.xpose.msra.mxu0 %v61
    %693 = vmatprep.subr.mxu0 %v56
    %694 = vmatpush1.xpose.msra.mxu0 %v55
    %695 = vmatprep.subr.mxu0 %v242
    %696 = vmatpush2.xpose.msra.mxu0 %v241
    %697 = vmatprep.subr.mxu0 %v236
    %698 = vmatpush2.xpose.msra.mxu0 %v235
    %699 = vmatprep.subr.mxu0 %v230
    %700 = vmatpush2.xpose.msra.mxu0 %v229
    %701 = vmatprep.subr.mxu0 %v224
    %702 = vmatpush2.xpose.msra.mxu0 %v223
    %703 = vmatprep.subr.mxu0 %v218
    %704 = vmatpush2.xpose.msra.mxu0 %v217
    %705 = vmatprep.subr.mxu0 %v212
    %706 = vmatpush2.xpose.msra.mxu0 %v211
    %707 = vmatprep.subr.mxu0 %v206
    %708 = vmatpush2.xpose.msra.mxu0 %v205
    %709 = vmatprep.subr.mxu0 %v200
    %710 = vmatpush2.xpose.msra.mxu0 %v199
    %711 = vmatprep.subr.mxu0 %v194
    %712 = vmatpush2.xpose.msra.mxu0 %v193
    %713 = vmatprep.subr.mxu0 %v188
    %714 = vmatpush2.xpose.msra.mxu0 %v187
    %715 = vmatprep.subr.mxu0 %v182
    %716 = vmatpush2.xpose.msra.mxu0 %v181
    %717 = vmatprep.subr.mxu0 %v176
    %718 = vmatpush2.xpose.msra.mxu0 %v175
    %719 = vmatprep.subr.mxu0 %v170
    %720 = vmatpush2.xpose.msra.mxu0 %v169
    %721 = vmatprep.subr.mxu0 %v164
    %722 = vmatpush2.xpose.msra.mxu0 %v163
    %723 = vmatprep.subr.mxu0 %v158
    %724 = vmatpush2.xpose.msra.mxu0 %v157
    %725 = vmatprep.subr.mxu0 %v152
    %726 = vmatpush2.xpose.msra.mxu0 %v151
    %727 = vmatprep.mubr.f32.mxu0 %v44
    %728 = vmatmul.mubr.f32.gmra.mxu0 %v43
    %v729 = vpop.f32.mrf.mxu0
    %v730 = vadd.f32 %v636, %v729
    %v731 = vpop.f32.mrf.mxu0
    %v732 = vadd.f32 %v640, %v731
    %733 = vmatprep.mubr.f32.mxu0 %v50
    %734 = vmatmul.mubr.f32.gmra.mxu0 %v49
    %v735 = vpop.f32.mrf.mxu0
    %v736 = vadd.f32 %v636, %v735
    %v737 = vpop.f32.mrf.mxu0
    %v738 = vadd.f32 %v640, %v737
    %739 = vdwg.mxu0
    %740 = vmatprep.subr.mxu0 %v148
    %741 = vmatpush1.xpose.msra.mxu0 %v147
    %742 = vmatprep.subr.mxu0 %v142
    %743 = vmatpush1.xpose.msra.mxu0 %v141
    %744 = vmatprep.subr.mxu0 %v136
    %745 = vmatpush1.xpose.msra.mxu0 %v135
    %746 = vmatprep.subr.mxu0 %v130
    %747 = vmatpush1.xpose.msra.mxu0 %v129
    %748 = vmatprep.subr.mxu0 %v124
    %749 = vmatpush1.xpose.msra.mxu0 %v123
    %750 = vmatprep.subr.mxu0 %v118
    %751 = vmatpush1.xpose.msra.mxu0 %v117
    %752 = vmatprep.subr.mxu0 %v112
    %753 = vmatpush1.xpose.msra.mxu0 %v111
    %754 = vmatprep.subr.mxu0 %v106
    %755 = vmatpush1.xpose.msra.mxu0 %v105
    %756 = vmatprep.subr.mxu0 %v100
    %757 = vmatpush1.xpose.msra.mxu0 %v99
    %758 = vmatprep.subr.mxu0 %v94
    %759 = vmatpush1.xpose.msra.mxu0 %v93
    %760 = vmatprep.subr.mxu0 %v88
    %761 = vmatpush1.xpose.msra.mxu0 %v87
    %762 = vmatprep.subr.mxu0 %v82
    %763 = vmatpush1.xpose.msra.mxu0 %v81
    %764 = vmatprep.subr.mxu0 %v76
    %765 = vmatpush1.xpose.msra.mxu0 %v75
    %766 = vmatprep.subr.mxu0 %v70
    %767 = vmatpush1.xpose.msra.mxu0 %v69
    %768 = vmatprep.subr.mxu0 %v64
    %769 = vmatpush1.xpose.msra.mxu0 %v63
    %770 = vmatprep.subr.mxu0 %v58
    %771 = vmatpush1.xpose.msra.mxu0 %v57
    %772 = vmatprep.subr.mxu0 %v244
    %773 = vmatpush2.xpose.msra.mxu0 %v243
    %774 = vmatprep.subr.mxu0 %v238
    %775 = vmatpush2.xpose.msra.mxu0 %v237
    %776 = vmatprep.subr.mxu0 %v232
    %777 = vmatpush2.xpose.msra.mxu0 %v231
    %778 = vmatprep.subr.mxu0 %v226
    %779 = vmatpush2.xpose.msra.mxu0 %v225
    %780 = vmatprep.subr.mxu0 %v220
    %781 = vmatpush2.xpose.msra.mxu0 %v219
    %782 = vmatprep.subr.mxu0 %v214
    %783 = vmatpush2.xpose.msra.mxu0 %v213
    %784 = vmatprep.subr.mxu0 %v208
    %785 = vmatpush2.xpose.msra.mxu0 %v207
    %786 = vmatprep.subr.mxu0 %v202
    %787 = vmatpush2.xpose.msra.mxu0 %v201
    %788 = vmatprep.subr.mxu0 %v196
    %789 = vmatpush2.xpose.msra.mxu0 %v195
    %790 = vmatprep.subr.mxu0 %v190
    %791 = vmatpush2.xpose.msra.mxu0 %v189
    %792 = vmatprep.subr.mxu0 %v184
    %793 = vmatpush2.xpose.msra.mxu0 %v183
    %794 = vmatprep.subr.mxu0 %v178
    %795 = vmatpush2.xpose.msra.mxu0 %v177
    %796 = vmatprep.subr.mxu0 %v172
    %797 = vmatpush2.xpose.msra.mxu0 %v171
    %798 = vmatprep.subr.mxu0 %v166
    %799 = vmatpush2.xpose.msra.mxu0 %v165
    %800 = vmatprep.subr.mxu0 %v160
    %801 = vmatpush2.xpose.msra.mxu0 %v159
    %802 = vmatprep.subr.mxu0 %v154
    %803 = vmatpush2.xpose.msra.mxu0 %v153
    %804 = vmatprep.mubr.f32.mxu0 %v46
    %805 = vmatmul.mubr.f32.gmra.mxu0 %v45
    %v806 = vpop.f32.mrf.mxu0
    %v807 = vadd.f32 %v730, %v806
    %v808 = vpop.f32.mrf.mxu0
    %v809 = vadd.f32 %v732, %v808
    %810 = vmatprep.mubr.f32.mxu0 %v52
    %811 = vmatmul.mubr.f32.gmra.mxu0 %v51
    %v812 = vpop.f32.mrf.mxu0
    %v813 = vadd.f32 %v736, %v812
    %v814 = vpop.f32.mrf.mxu0
    %v815 = vadd.f32 %v738, %v814
    %816 = vdwg.mxu0
    %817 = vmatprep.subr.mxu0 %v150
    %818 = vmatpush1.xpose.msra.mxu0 %v149
    %819 = vmatprep.subr.mxu0 %v144
    %820 = vmatpush1.xpose.msra.mxu0 %v143
    %821 = vmatprep.subr.mxu0 %v138
    %822 = vmatpush1.xpose.msra.mxu0 %v137
    %823 = vmatprep.subr.mxu0 %v132
    %824 = vmatpush1.xpose.msra.mxu0 %v131
    %825 = vmatprep.subr.mxu0 %v126
    %826 = vmatpush1.xpose.msra.mxu0 %v125
    %827 = vmatprep.subr.mxu0 %v120
    %828 = vmatpush1.xpose.msra.mxu0 %v119
    %829 = vmatprep.subr.mxu0 %v114
    %830 = vmatpush1.xpose.msra.mxu0 %v113
    %831 = vmatprep.subr.mxu0 %v108
    %832 = vmatpush1.xpose.msra.mxu0 %v107
    %833 = vmatprep.subr.mxu0 %v102
    %834 = vmatpush1.xpose.msra.mxu0 %v101
    %835 = vmatprep.subr.mxu0 %v96
    %836 = vmatpush1.xpose.msra.mxu0 %v95
    %837 = vmatprep.subr.mxu0 %v90
    %838 = vmatpush1.xpose.msra.mxu0 %v89
    %839 = vmatprep.subr.mxu0 %v84
    %840 = vmatpush1.xpose.msra.mxu0 %v83
    %841 = vmatprep.subr.mxu0 %v78
    %842 = vmatpush1.xpose.msra.mxu0 %v77
    %843 = vmatprep.subr.mxu0 %v72
    %844 = vmatpush1.xpose.msra.mxu0 %v71
    %845 = vmatprep.subr.mxu0 %v66
    %846 = vmatpush1.xpose.msra.mxu0 %v65
    %847 = vmatprep.subr.mxu0 %v60
    %848 = vmatpush1.xpose.msra.mxu0 %v59
    %849 = vmatprep.subr.mxu0 %v246
    %850 = vmatpush2.xpose.msra.mxu0 %v245
    %851 = vmatprep.subr.mxu0 %v240
    %852 = vmatpush2.xpose.msra.mxu0 %v239
    %853 = vmatprep.subr.mxu0 %v234
    %854 = vmatpush2.xpose.msra.mxu0 %v233
    %855 = vmatprep.subr.mxu0 %v228
    %856 = vmatpush2.xpose.msra.mxu0 %v227
    %857 = vmatprep.subr.mxu0 %v222
    %858 = vmatpush2.xpose.msra.mxu0 %v221
    %859 = vmatprep.subr.mxu0 %v216
    %860 = vmatpush2.xpose.msra.mxu0 %v215
    %861 = vmatprep.subr.mxu0 %v210
    %862 = vmatpush2.xpose.msra.mxu0 %v209
    %863 = vmatprep.subr.mxu0 %v204
    %864 = vmatpush2.xpose.msra.mxu0 %v203
    %865 = vmatprep.subr.mxu0 %v198
    %866 = vmatpush2.xpose.msra.mxu0 %v197
    %867 = vmatprep.subr.mxu0 %v192
    %868 = vmatpush2.xpose.msra.mxu0 %v191
    %869 = vmatprep.subr.mxu0 %v186
    %870 = vmatpush2.xpose.msra.mxu0 %v185
    %871 = vmatprep.subr.mxu0 %v180
    %872 = vmatpush2.xpose.msra.mxu0 %v179
    %873 = vmatprep.subr.mxu0 %v174
    %874 = vmatpush2.xpose.msra.mxu0 %v173
    %875 = vmatprep.subr.mxu0 %v168
    %876 = vmatpush2.xpose.msra.mxu0 %v167
    %877 = vmatprep.subr.mxu0 %v162
    %878 = vmatpush2.xpose.msra.mxu0 %v161
    %879 = vmatprep.subr.mxu0 %v156
    %880 = vmatpush2.xpose.msra.mxu0 %v155
    %881 = vmatprep.mubr.f32.mxu0 %v48
    %882 = vmatmul.mubr.f32.gmra.mxu0 %v47
    %v883 = vpop.f32.mrf.mxu0
    %v884 = vadd.f32 %v807, %v883
    %v885 = vpop.f32.mrf.mxu0
    %v886 = vadd.f32 %v809, %v885
    %887 = vmatprep.mubr.f32.mxu0 %v54
    %888 = vmatmul.mubr.f32.gmra.mxu0 %v53
    %v889 = vpop.f32.mrf.mxu0
    %v890 = vadd.f32 %v813, %v889
    %v891 = vpop.f32.mrf.mxu0
    %v892 = vadd.f32 %v815, %v891
    %893 = vdwg.mxu0
    %894 = vmatprep.subr.mxu0 %v338
    %895 = vmatpush1.xpose.msra.mxu0 %v337
    %896 = vmatprep.subr.mxu0 %v332
    %897 = vmatpush1.xpose.msra.mxu0 %v331
    %898 = vmatprep.subr.mxu0 %v326
    %899 = vmatpush1.xpose.msra.mxu0 %v325
    %900 = vmatprep.subr.mxu0 %v320
    %901 = vmatpush1.xpose.msra.mxu0 %v319
    %902 = vmatprep.subr.mxu0 %v314
    %903 = vmatpush1.xpose.msra.mxu0 %v313
    %904 = vmatprep.subr.mxu0 %v308
    %905 = vmatpush1.xpose.msra.mxu0 %v307
    %906 = vmatprep.subr.mxu0 %v302
    %907 = vmatpush1.xpose.msra.mxu0 %v301
    %908 = vmatprep.subr.mxu0 %v296
    %909 = vmatpush1.xpose.msra.mxu0 %v295
    %910 = vmatprep.subr.mxu0 %v290
    %911 = vmatpush1.xpose.msra.mxu0 %v289
    %912 = vmatprep.subr.mxu0 %v284
    %913 = vmatpush1.xpose.msra.mxu0 %v283
    %914 = vmatprep.subr.mxu0 %v278
    %915 = vmatpush1.xpose.msra.mxu0 %v277
    %916 = vmatprep.subr.mxu0 %v272
    %917 = vmatpush1.xpose.msra.mxu0 %v271
    %918 = vmatprep.subr.mxu0 %v266
    %919 = vmatpush1.xpose.msra.mxu0 %v265
    %920 = vmatprep.subr.mxu0 %v260
    %921 = vmatpush1.xpose.msra.mxu0 %v259
    %922 = vmatprep.subr.mxu0 %v254
    %923 = vmatpush1.xpose.msra.mxu0 %v253
    %924 = vmatprep.subr.mxu0 %v248
    %925 = vmatpush1.xpose.msra.mxu0 %v247
    %926 = vmatprep.subr.mxu0 %v434
    %927 = vmatpush2.xpose.msra.mxu0 %v433
    %928 = vmatprep.subr.mxu0 %v428
    %929 = vmatpush2.xpose.msra.mxu0 %v427
    %930 = vmatprep.subr.mxu0 %v422
    %931 = vmatpush2.xpose.msra.mxu0 %v421
    %932 = vmatprep.subr.mxu0 %v416
    %933 = vmatpush2.xpose.msra.mxu0 %v415
    %934 = vmatprep.subr.mxu0 %v410
    %935 = vmatpush2.xpose.msra.mxu0 %v409
    %936 = vmatprep.subr.mxu0 %v404
    %937 = vmatpush2.xpose.msra.mxu0 %v403
    %938 = vmatprep.subr.mxu0 %v398
    %939 = vmatpush2.xpose.msra.mxu0 %v397
    %940 = vmatprep.subr.mxu0 %v392
    %941 = vmatpush2.xpose.msra.mxu0 %v391
    %942 = vmatprep.subr.mxu0 %v386
    %943 = vmatpush2.xpose.msra.mxu0 %v385
    %944 = vmatprep.subr.mxu0 %v380
    %945 = vmatpush2.xpose.msra.mxu0 %v379
    %946 = vmatprep.subr.mxu0 %v374
    %947 = vmatpush2.xpose.msra.mxu0 %v373
    %948 = vmatprep.subr.mxu0 %v368
    %949 = vmatpush2.xpose.msra.mxu0 %v367
    %950 = vmatprep.subr.mxu0 %v362
    %951 = vmatpush2.xpose.msra.mxu0 %v361
    %952 = vmatprep.subr.mxu0 %v356
    %953 = vmatpush2.xpose.msra.mxu0 %v355
    %954 = vmatprep.subr.mxu0 %v350
    %955 = vmatpush2.xpose.msra.mxu0 %v349
    %956 = vmatprep.subr.mxu0 %v344
    %957 = vmatpush2.xpose.msra.mxu0 %v343
    %958 = vmatprep.mubr.f32.mxu0 %v44
    %959 = vmatmul.mubr.f32.gmra.mxu0 %v43
    %v960 = vpop.f32.mrf.mxu0
    %v961 = vadd.f32 %v644, %v960
    %v962 = vpop.f32.mrf.mxu0
    %v963 = vadd.f32 %v648, %v962
    %964 = vmatprep.mubr.f32.mxu0 %v50
    %965 = vmatmul.mubr.f32.gmra.mxu0 %v49
    %v966 = vpop.f32.mrf.mxu0
    %v967 = vadd.f32 %v644, %v966
    %v968 = vpop.f32.mrf.mxu0
    %v969 = vadd.f32 %v648, %v968
    %970 = vdwg.mxu0
    %971 = vmatprep.subr.mxu0 %v340
    %972 = vmatpush1.xpose.msra.mxu0 %v339
    %973 = vmatprep.subr.mxu0 %v334
    %974 = vmatpush1.xpose.msra.mxu0 %v333
    %975 = vmatprep.subr.mxu0 %v328
    %976 = vmatpush1.xpose.msra.mxu0 %v327
    %977 = vmatprep.subr.mxu0 %v322
    %978 = vmatpush1.xpose.msra.mxu0 %v321
    %979 = vmatprep.subr.mxu0 %v316
    %980 = vmatpush1.xpose.msra.mxu0 %v315
    %981 = vmatprep.subr.mxu0 %v310
    %982 = vmatpush1.xpose.msra.mxu0 %v309
    %983 = vmatprep.subr.mxu0 %v304
    %984 = vmatpush1.xpose.msra.mxu0 %v303
    %985 = vmatprep.subr.mxu0 %v298
    %986 = vmatpush1.xpose.msra.mxu0 %v297
    %987 = vmatprep.subr.mxu0 %v292
    %988 = vmatpush1.xpose.msra.mxu0 %v291
    %989 = vmatprep.subr.mxu0 %v286
    %990 = vmatpush1.xpose.msra.mxu0 %v285
    %991 = vmatprep.subr.mxu0 %v280
    %992 = vmatpush1.xpose.msra.mxu0 %v279
    %993 = vmatprep.subr.mxu0 %v274
    %994 = vmatpush1.xpose.msra.mxu0 %v273
    %995 = vmatprep.subr.mxu0 %v268
    %996 = vmatpush1.xpose.msra.mxu0 %v267
    %997 = vmatprep.subr.mxu0 %v262
    %998 = vmatpush1.xpose.msra.mxu0 %v261
    %999 = vmatprep.subr.mxu0 %v256
    %1000 = vmatpush1.xpose.msra.mxu0 %v255
    %1001 = vmatprep.subr.mxu0 %v250
    %1002 = vmatpush1.xpose.msra.mxu0 %v249
    %1003 = vmatprep.subr.mxu0 %v436
    %1004 = vmatpush2.xpose.msra.mxu0 %v435
    %1005 = vmatprep.subr.mxu0 %v430
    %1006 = vmatpush2.xpose.msra.mxu0 %v429
    %1007 = vmatprep.subr.mxu0 %v424
    %1008 = vmatpush2.xpose.msra.mxu0 %v423
    %1009 = vmatprep.subr.mxu0 %v418
    %1010 = vmatpush2.xpose.msra.mxu0 %v417
    %1011 = vmatprep.subr.mxu0 %v412
    %1012 = vmatpush2.xpose.msra.mxu0 %v411
    %1013 = vmatprep.subr.mxu0 %v406
    %1014 = vmatpush2.xpose.msra.mxu0 %v405
    %1015 = vmatprep.subr.mxu0 %v400
    %1016 = vmatpush2.xpose.msra.mxu0 %v399
    %1017 = vmatprep.subr.mxu0 %v394
    %1018 = vmatpush2.xpose.msra.mxu0 %v393
    %1019 = vmatprep.subr.mxu0 %v388
    %1020 = vmatpush2.xpose.msra.mxu0 %v387
    %1021 = vmatprep.subr.mxu0 %v382
    %1022 = vmatpush2.xpose.msra.mxu0 %v381
    %1023 = vmatprep.subr.mxu0 %v376
    %1024 = vmatpush2.xpose.msra.mxu0 %v375
    %1025 = vmatprep.subr.mxu0 %v370
    %1026 = vmatpush2.xpose.msra.mxu0 %v369
    %1027 = vmatprep.subr.mxu0 %v364
    %1028 = vmatpush2.xpose.msra.mxu0 %v363
    %1029 = vmatprep.subr.mxu0 %v358
    %1030 = vmatpush2.xpose.msra.mxu0 %v357
    %1031 = vmatprep.subr.mxu0 %v352
    %1032 = vmatpush2.xpose.msra.mxu0 %v351
    %1033 = vmatprep.subr.mxu0 %v346
    %1034 = vmatpush2.xpose.msra.mxu0 %v345
    %1035 = vmatprep.mubr.f32.mxu0 %v46
    %1036 = vmatmul.mubr.f32.gmra.mxu0 %v45
    %v1037 = vpop.f32.mrf.mxu0
    %v1038 = vadd.f32 %v961, %v1037
    %v1039 = vpop.f32.mrf.mxu0
    %v1040 = vadd.f32 %v963, %v1039
    %1041 = vmatprep.mubr.f32.mxu0 %v52
    %1042 = vmatmul.mubr.f32.gmra.mxu0 %v51
    %v1043 = vpop.f32.mrf.mxu0
    %v1044 = vadd.f32 %v967, %v1043
    %v1045 = vpop.f32.mrf.mxu0
    %v1046 = vadd.f32 %v969, %v1045
    %1047 = vdwg.mxu0
    %1048 = vmatprep.subr.mxu0 %v342
    %1049 = vmatpush1.xpose.msra.mxu0 %v341
    %1050 = vmatprep.subr.mxu0 %v336
    %1051 = vmatpush1.xpose.msra.mxu0 %v335
    %1052 = vmatprep.subr.mxu0 %v330
    %1053 = vmatpush1.xpose.msra.mxu0 %v329
    %1054 = vmatprep.subr.mxu0 %v324
    %1055 = vmatpush1.xpose.msra.mxu0 %v323
    %1056 = vmatprep.subr.mxu0 %v318
    %1057 = vmatpush1.xpose.msra.mxu0 %v317
    %1058 = vmatprep.subr.mxu0 %v312
    %1059 = vmatpush1.xpose.msra.mxu0 %v311
    %1060 = vmatprep.subr.mxu0 %v306
    %1061 = vmatpush1.xpose.msra.mxu0 %v305
    %1062 = vmatprep.subr.mxu0 %v300
    %1063 = vmatpush1.xpose.msra.mxu0 %v299
    %1064 = vmatprep.subr.mxu0 %v294
    %1065 = vmatpush1.xpose.msra.mxu0 %v293
    %1066 = vmatprep.subr.mxu0 %v288
    %1067 = vmatpush1.xpose.msra.mxu0 %v287
    %1068 = vmatprep.subr.mxu0 %v282
    %1069 = vmatpush1.xpose.msra.mxu0 %v281
    %1070 = vmatprep.subr.mxu0 %v276
    %1071 = vmatpush1.xpose.msra.mxu0 %v275
    %1072 = vmatprep.subr.mxu0 %v270
    %1073 = vmatpush1.xpose.msra.mxu0 %v269
    %1074 = vmatprep.subr.mxu0 %v264
    %1075 = vmatpush1.xpose.msra.mxu0 %v263
    %1076 = vmatprep.subr.mxu0 %v258
    %1077 = vmatpush1.xpose.msra.mxu0 %v257
    %1078 = vmatprep.subr.mxu0 %v252
    %1079 = vmatpush1.xpose.msra.mxu0 %v251
    %1080 = vmatprep.subr.mxu0 %v438
    %1081 = vmatpush2.xpose.msra.mxu0 %v437
    %1082 = vmatprep.subr.mxu0 %v432
    %1083 = vmatpush2.xpose.msra.mxu0 %v431
    %1084 = vmatprep.subr.mxu0 %v426
    %1085 = vmatpush2.xpose.msra.mxu0 %v425
    %1086 = vmatprep.subr.mxu0 %v420
    %1087 = vmatpush2.xpose.msra.mxu0 %v419
    %1088 = vmatprep.subr.mxu0 %v414
    %1089 = vmatpush2.xpose.msra.mxu0 %v413
    %1090 = vmatprep.subr.mxu0 %v408
    %1091 = vmatpush2.xpose.msra.mxu0 %v407
    %1092 = vmatprep.subr.mxu0 %v402
    %1093 = vmatpush2.xpose.msra.mxu0 %v401
    %1094 = vmatprep.subr.mxu0 %v396
    %1095 = vmatpush2.xpose.msra.mxu0 %v395
    %1096 = vmatprep.subr.mxu0 %v390
    %1097 = vmatpush2.xpose.msra.mxu0 %v389
    %1098 = vmatprep.subr.mxu0 %v384
    %1099 = vmatpush2.xpose.msra.mxu0 %v383
    %1100 = vmatprep.subr.mxu0 %v378
    %1101 = vmatpush2.xpose.msra.mxu0 %v377
    %1102 = vmatprep.subr.mxu0 %v372
    %1103 = vmatpush2.xpose.msra.mxu0 %v371
    %1104 = vmatprep.subr.mxu0 %v366
    %1105 = vmatpush2.xpose.msra.mxu0 %v365
    %1106 = vmatprep.subr.mxu0 %v360
    %1107 = vmatpush2.xpose.msra.mxu0 %v359
    %1108 = vmatprep.subr.mxu0 %v354
    %1109 = vmatpush2.xpose.msra.mxu0 %v353
    %1110 = vmatprep.subr.mxu0 %v348
    %1111 = vmatpush2.xpose.msra.mxu0 %v347
    %1112 = vmatprep.mubr.f32.mxu0 %v48
    %1113 = vmatmul.mubr.f32.gmra.mxu0 %v47
    %v1114 = vpop.f32.mrf.mxu0
    %v1115 = vadd.f32 %v1038, %v1114
    %v1116 = vpop.f32.mrf.mxu0
    %v1117 = vadd.f32 %v1040, %v1116
    %1118 = vmatprep.mubr.f32.mxu0 %v54
    %1119 = vmatmul.mubr.f32.gmra.mxu0 %v53
    %v1120 = vpop.f32.mrf.mxu0
    %v1121 = vadd.f32 %v1044, %v1120
    %v1122 = vpop.f32.mrf.mxu0
    %v1123 = vadd.f32 %v1046, %v1122
    %1124 = vdwg.mxu0
    %1125 = vmatprep.subr.mxu0 %v530
    %1126 = vmatpush1.xpose.msra.mxu0 %v529
    %1127 = vmatprep.subr.mxu0 %v524
    %1128 = vmatpush1.xpose.msra.mxu0 %v523
    %1129 = vmatprep.subr.mxu0 %v518
    %1130 = vmatpush1.xpose.msra.mxu0 %v517
    %1131 = vmatprep.subr.mxu0 %v512
    %1132 = vmatpush1.xpose.msra.mxu0 %v511
    %1133 = vmatprep.subr.mxu0 %v506
    %1134 = vmatpush1.xpose.msra.mxu0 %v505
    %1135 = vmatprep.subr.mxu0 %v500
    %1136 = vmatpush1.xpose.msra.mxu0 %v499
    %1137 = vmatprep.subr.mxu0 %v494
    %1138 = vmatpush1.xpose.msra.mxu0 %v493
    %1139 = vmatprep.subr.mxu0 %v488
    %1140 = vmatpush1.xpose.msra.mxu0 %v487
    %1141 = vmatprep.subr.mxu0 %v482
    %1142 = vmatpush1.xpose.msra.mxu0 %v481
    %1143 = vmatprep.subr.mxu0 %v476
    %1144 = vmatpush1.xpose.msra.mxu0 %v475
    %1145 = vmatprep.subr.mxu0 %v470
    %1146 = vmatpush1.xpose.msra.mxu0 %v469
    %1147 = vmatprep.subr.mxu0 %v464
    %1148 = vmatpush1.xpose.msra.mxu0 %v463
    %1149 = vmatprep.subr.mxu0 %v458
    %1150 = vmatpush1.xpose.msra.mxu0 %v457
    %1151 = vmatprep.subr.mxu0 %v452
    %1152 = vmatpush1.xpose.msra.mxu0 %v451
    %1153 = vmatprep.subr.mxu0 %v446
    %1154 = vmatpush1.xpose.msra.mxu0 %v445
    %1155 = vmatprep.subr.mxu0 %v440
    %1156 = vmatpush1.xpose.msra.mxu0 %v439
    %1157 = vmatprep.subr.mxu0 %v626
    %1158 = vmatpush2.xpose.msra.mxu0 %v625
    %1159 = vmatprep.subr.mxu0 %v620
    %1160 = vmatpush2.xpose.msra.mxu0 %v619
    %1161 = vmatprep.subr.mxu0 %v614
    %1162 = vmatpush2.xpose.msra.mxu0 %v613
    %1163 = vmatprep.subr.mxu0 %v608
    %1164 = vmatpush2.xpose.msra.mxu0 %v607
    %1165 = vmatprep.subr.mxu0 %v602
    %1166 = vmatpush2.xpose.msra.mxu0 %v601
    %1167 = vmatprep.subr.mxu0 %v596
    %1168 = vmatpush2.xpose.msra.mxu0 %v595
    %1169 = vmatprep.subr.mxu0 %v590
    %1170 = vmatpush2.xpose.msra.mxu0 %v589
    %1171 = vmatprep.subr.mxu0 %v584
    %1172 = vmatpush2.xpose.msra.mxu0 %v583
    %1173 = vmatprep.subr.mxu0 %v578
    %1174 = vmatpush2.xpose.msra.mxu0 %v577
    %1175 = vmatprep.subr.mxu0 %v572
    %1176 = vmatpush2.xpose.msra.mxu0 %v571
    %1177 = vmatprep.subr.mxu0 %v566
    %1178 = vmatpush2.xpose.msra.mxu0 %v565
    %1179 = vmatprep.subr.mxu0 %v560
    %1180 = vmatpush2.xpose.msra.mxu0 %v559
    %1181 = vmatprep.subr.mxu0 %v554
    %1182 = vmatpush2.xpose.msra.mxu0 %v553
    %1183 = vmatprep.subr.mxu0 %v548
    %1184 = vmatpush2.xpose.msra.mxu0 %v547
    %1185 = vmatprep.subr.mxu0 %v542
    %1186 = vmatpush2.xpose.msra.mxu0 %v541
    %1187 = vmatprep.subr.mxu0 %v536
    %1188 = vmatpush2.xpose.msra.mxu0 %v535
    %1189 = vmatprep.mubr.f32.mxu0 %v44
    %1190 = vmatmul.mubr.f32.gmra.mxu0 %v43
    %v1191 = vpop.f32.mrf.mxu0
    %v1192 = vadd.f32 %v652, %v1191
    %v1193 = vpop.f32.mrf.mxu0
    %v1194 = vadd.f32 %v656, %v1193
    %1195 = vmatprep.mubr.f32.mxu0 %v50
    %1196 = vmatmul.mubr.f32.gmra.mxu0 %v49
    %v1197 = vpop.f32.mrf.mxu0
    %v1198 = vadd.f32 %v652, %v1197
    %v1199 = vpop.f32.mrf.mxu0
    %v1200 = vadd.f32 %v656, %v1199
    %1201 = vdwg.mxu0
    %1202 = vmatprep.subr.mxu0 %v532
    %1203 = vmatpush1.xpose.msra.mxu0 %v531
    %1204 = vmatprep.subr.mxu0 %v526
    %1205 = vmatpush1.xpose.msra.mxu0 %v525
    %1206 = vmatprep.subr.mxu0 %v520
    %1207 = vmatpush1.xpose.msra.mxu0 %v519
    %1208 = vmatprep.subr.mxu0 %v514
    %1209 = vmatpush1.xpose.msra.mxu0 %v513
    %1210 = vmatprep.subr.mxu0 %v508
    %1211 = vmatpush1.xpose.msra.mxu0 %v507
    %1212 = vmatprep.subr.mxu0 %v502
    %1213 = vmatpush1.xpose.msra.mxu0 %v501
    %1214 = vmatprep.subr.mxu0 %v496
    %1215 = vmatpush1.xpose.msra.mxu0 %v495
    %1216 = vmatprep.subr.mxu0 %v490
    %1217 = vmatpush1.xpose.msra.mxu0 %v489
    %1218 = vmatprep.subr.mxu0 %v484
    %1219 = vmatpush1.xpose.msra.mxu0 %v483
    %1220 = vmatprep.subr.mxu0 %v478
    %1221 = vmatpush1.xpose.msra.mxu0 %v477
    %1222 = vmatprep.subr.mxu0 %v472
    %1223 = vmatpush1.xpose.msra.mxu0 %v471
    %1224 = vmatprep.subr.mxu0 %v466
    %1225 = vmatpush1.xpose.msra.mxu0 %v465
    %1226 = vmatprep.subr.mxu0 %v460
    %1227 = vmatpush1.xpose.msra.mxu0 %v459
    %1228 = vmatprep.subr.mxu0 %v454
    %1229 = vmatpush1.xpose.msra.mxu0 %v453
    %1230 = vmatprep.subr.mxu0 %v448
    %1231 = vmatpush1.xpose.msra.mxu0 %v447
    %1232 = vmatprep.subr.mxu0 %v442
    %1233 = vmatpush1.xpose.msra.mxu0 %v441
    %1234 = vmatprep.subr.mxu0 %v628
    %1235 = vmatpush2.xpose.msra.mxu0 %v627
    %1236 = vmatprep.subr.mxu0 %v622
    %1237 = vmatpush2.xpose.msra.mxu0 %v621
    %1238 = vmatprep.subr.mxu0 %v616
    %1239 = vmatpush2.xpose.msra.mxu0 %v615
    %1240 = vmatprep.subr.mxu0 %v610
    %1241 = vmatpush2.xpose.msra.mxu0 %v609
    %1242 = vmatprep.subr.mxu0 %v604
    %1243 = vmatpush2.xpose.msra.mxu0 %v603
    %1244 = vmatprep.subr.mxu0 %v598
    %1245 = vmatpush2.xpose.msra.mxu0 %v597
    %1246 = vmatprep.subr.mxu0 %v592
    %1247 = vmatpush2.xpose.msra.mxu0 %v591
    %1248 = vmatprep.subr.mxu0 %v586
    %1249 = vmatpush2.xpose.msra.mxu0 %v585
    %1250 = vmatprep.subr.mxu0 %v580
    %1251 = vmatpush2.xpose.msra.mxu0 %v579
    %1252 = vmatprep.subr.mxu0 %v574
    %1253 = vmatpush2.xpose.msra.mxu0 %v573
    %1254 = vmatprep.subr.mxu0 %v568
    %1255 = vmatpush2.xpose.msra.mxu0 %v567
    %1256 = vmatprep.subr.mxu0 %v562
    %1257 = vmatpush2.xpose.msra.mxu0 %v561
    %1258 = vmatprep.subr.mxu0 %v556
    %1259 = vmatpush2.xpose.msra.mxu0 %v555
    %1260 = vmatprep.subr.mxu0 %v550
    %1261 = vmatpush2.xpose.msra.mxu0 %v549
    %1262 = vmatprep.subr.mxu0 %v544
    %1263 = vmatpush2.xpose.msra.mxu0 %v543
    %1264 = vmatprep.subr.mxu0 %v538
    %1265 = vmatpush2.xpose.msra.mxu0 %v537
    %1266 = vmatprep.mubr.f32.mxu0 %v46
    %1267 = vmatmul.mubr.f32.gmra.mxu0 %v45
    %v1268 = vpop.f32.mrf.mxu0
    %v1269 = vadd.f32 %v1192, %v1268
    %v1270 = vpop.f32.mrf.mxu0
    %v1271 = vadd.f32 %v1194, %v1270
    %1272 = vmatprep.mubr.f32.mxu0 %v52
    %1273 = vmatmul.mubr.f32.gmra.mxu0 %v51
    %v1274 = vpop.f32.mrf.mxu0
    %v1275 = vadd.f32 %v1198, %v1274
    %v1276 = vpop.f32.mrf.mxu0
    %v1277 = vadd.f32 %v1200, %v1276
    %1278 = vdwg.mxu0
    %1279 = vmatprep.subr.mxu0 %v534
    %1280 = vmatpush1.xpose.msra.mxu0 %v533
    %1281 = vmatprep.subr.mxu0 %v528
    %1282 = vmatpush1.xpose.msra.mxu0 %v527
    %1283 = vmatprep.subr.mxu0 %v522
    %1284 = vmatpush1.xpose.msra.mxu0 %v521
    %1285 = vmatprep.subr.mxu0 %v516
    %1286 = vmatpush1.xpose.msra.mxu0 %v515
    %1287 = vmatprep.subr.mxu0 %v510
    %1288 = vmatpush1.xpose.msra.mxu0 %v509
    %1289 = vmatprep.subr.mxu0 %v504
    %1290 = vmatpush1.xpose.msra.mxu0 %v503
    %1291 = vmatprep.subr.mxu0 %v498
    %1292 = vmatpush1.xpose.msra.mxu0 %v497
    %1293 = vmatprep.subr.mxu0 %v492
    %1294 = vmatpush1.xpose.msra.mxu0 %v491
    %1295 = vmatprep.subr.mxu0 %v486
    %1296 = vmatpush1.xpose.msra.mxu0 %v485
    %1297 = vmatprep.subr.mxu0 %v480
    %1298 = vmatpush1.xpose.msra.mxu0 %v479
    %1299 = vmatprep.subr.mxu0 %v474
    %1300 = vmatpush1.xpose.msra.mxu0 %v473
    %1301 = vmatprep.subr.mxu0 %v468
    %1302 = vmatpush1.xpose.msra.mxu0 %v467
    %1303 = vmatprep.subr.mxu0 %v462
    %1304 = vmatpush1.xpose.msra.mxu0 %v461
    %1305 = vmatprep.subr.mxu0 %v456
    %1306 = vmatpush1.xpose.msra.mxu0 %v455
    %1307 = vmatprep.subr.mxu0 %v450
    %1308 = vmatpush1.xpose.msra.mxu0 %v449
    %1309 = vmatprep.subr.mxu0 %v444
    %1310 = vmatpush1.xpose.msra.mxu0 %v443
    %1311 = vmatprep.subr.mxu0 %v630
    %1312 = vmatpush2.xpose.msra.mxu0 %v629
    %1313 = vmatprep.subr.mxu0 %v624
    %1314 = vmatpush2.xpose.msra.mxu0 %v623
    %1315 = vmatprep.subr.mxu0 %v618
    %1316 = vmatpush2.xpose.msra.mxu0 %v617
    %1317 = vmatprep.subr.mxu0 %v612
    %1318 = vmatpush2.xpose.msra.mxu0 %v611
    %1319 = vmatprep.subr.mxu0 %v606
    %1320 = vmatpush2.xpose.msra.mxu0 %v605
    %1321 = vmatprep.subr.mxu0 %v600
    %1322 = vmatpush2.xpose.msra.mxu0 %v599
    %1323 = vmatprep.subr.mxu0 %v594
    %1324 = vmatpush2.xpose.msra.mxu0 %v593
    %1325 = vmatprep.subr.mxu0 %v588
    %1326 = vmatpush2.xpose.msra.mxu0 %v587
    %1327 = vmatprep.subr.mxu0 %v582
    %1328 = vmatpush2.xpose.msra.mxu0 %v581
    %1329 = vmatprep.subr.mxu0 %v576
    %1330 = vmatpush2.xpose.msra.mxu0 %v575
    %1331 = vmatprep.subr.mxu0 %v570
    %1332 = vmatpush2.xpose.msra.mxu0 %v569
    %1333 = vmatprep.subr.mxu0 %v564
    %1334 = vmatpush2.xpose.msra.mxu0 %v563
    %1335 = vmatprep.subr.mxu0 %v558
    %1336 = vmatpush2.xpose.msra.mxu0 %v557
    %1337 = vmatprep.subr.mxu0 %v552
    %1338 = vmatpush2.xpose.msra.mxu0 %v551
    %1339 = vmatprep.subr.mxu0 %v546
    %1340 = vmatpush2.xpose.msra.mxu0 %v545
    %1341 = vmatprep.subr.mxu0 %v540
    %1342 = vmatpush2.xpose.msra.mxu0 %v539
    %1343 = vmatprep.mubr.f32.mxu0 %v48
    %1344 = vmatmul.mubr.f32.gmra.mxu0 %v47
    %v1345 = vpop.f32.mrf.mxu0
    %v1346 = vadd.f32 %v1269, %v1345
    %v1347 = vpop.f32.mrf.mxu0
    %v1348 = vadd.f32 %v1271, %v1347
    %1349 = vmatprep.mubr.f32.mxu0 %v54
    %1350 = vmatmul.mubr.f32.gmra.mxu0 %v53
    %v1351 = vpop.f32.mrf.mxu0
    %v1352 = vadd.f32 %v1275, %v1351
    %v1353 = vpop.f32.mrf.mxu0
    %v1354 = vadd.f32 %v1277, %v1353
    %1355 = vdwg.mxu0
    %1356 = vst [vmem:[#allocation7] sm:$0xff] %v884
    %1357 = vst [vmem:[#allocation7 + $0x8] sm:$0xff] %v886
    %1358 = vst [vmem:[#allocation7 + $0x10] sm:$0xff] %v1115
    %1359 = vst [vmem:[#allocation7 + $0x18] sm:$0xff] %v1117
    %1360 = vst [vmem:[#allocation7 + $0x20] sm:$0xff] %v1346
    %1361 = vst [vmem:[#allocation7 + $0x28] sm:$0xff] %v1348
    %1362 = vst [vmem:[#allocation7 + $0x30] sm:$0xff] %v890
    %1363 = vst [vmem:[#allocation7 + $0x38] sm:$0xff] %v892
    %1364 = vst [vmem:[#allocation7 + $0x40] sm:$0xff] %v1121
    %1365 = vst [vmem:[#allocation7 + $0x48] sm:$0xff] %v1123
    %1366 = vst [vmem:[#allocation7 + $0x50] sm:$0xff] %v1352
    %1367 = vst [vmem:[#allocation7 + $0x58] sm:$0xff] %v1354
    // Predicated region
    $region22: #{single_linear.1} parent=1 // pred_check
      _
    $region23: #{single_linear.1} parent=1 // pred_check_branch
      %1369 = sbr.rel (0) target = $region25
    $region24: #{single_linear.1} parent=1 // pred_region
      %s1371 = ssub.s32 1536, 1536
      %1372 = vsyncadd [#allocation4], %s1371
      %s1373 = sshll.u32 [#allocation7], 4
      %s1374 = int_to_ptr.vmem [resolvable:$true] %s1373
      %1379 = dma.vmem_to_hbm [thread:$0]  %s1374, 1536, %s3, [#allocation4], 768, 768, 48
    $region25: #{single_linear.1} parent=1 // pred_fallthru
      _
    // Predicated region
    $region26: #{single_linear.1} parent=1 // pred_check
      _
    $region27: #{single_linear.1} parent=1 // pred_check_branch
      %1381 = sbr.rel (0) target = $region29
    $region28: #{single_linear.1} parent=1 // pred_region
      %1382 = dma.done [#allocation4], 1536
    $region29: #{single_linear.1} parent=1 // pred_fallthru
      _
    %1383 = vsyncpa [#allocation3], 1
    %1384 = vsyncpa [#allocation6], 1
    %1385 = vsyncpa [#allocation4], 1

</llo_original>
